<compile_context>
chip_gen: v5e
topology: v5e:2x2
jax: 0.10.0
libtpu: 0.0.40
codegen_flags: <defaults>
</compile_context>

<pallas_src>
import jax
import jax.numpy as jnp
from jax.experimental import pallas as pl
from jax.experimental.pallas import tpu as pltpu

EPS = 1e-5


def _make_kernel(N, Cin, Cout, H, W, K):
    """Builds the fused conv3x3 + training-mode BN kernel for static shapes."""
    HW = H * W
    M = N * HW

    def kernel(x_ref, hw_ref, w_ref, p_ref, o_ref):
        # x_ref : (Cin, M)          f32  raw input, pixels (n,h,w) flat on lanes
        # hw_ref: (2, M)            i32  row 0 = h index, row 1 = w index per pixel
        # w_ref : (K*K, Cout, Cin)  f32  conv taps
        # p_ref : (Cout, 2)         f32  col 0 = BN gamma, col 1 = BN beta
        # o_ref : (N, Cout, HW)     f32  lane-dense output (free reshape outside)
        x = x_ref[...]                                   # (Cin, M)
        h_idx = hw_ref[0:1, :]                           # (1, M) int32
        w_idx = hw_ref[1:2, :]                           # (1, M) int32

        acc = jnp.zeros((Cout, M), jnp.float32)
        # Fused im2col: for each 3x3 tap, gather the shifted neighbors with a
        # lane roll (wrap-around content is killed by the boundary mask below)
        # and accumulate a (Cout,Cin) x (Cin,M) matmul into the f32 accumulator.
        for dh in range(K):
            for dw in range(K):
                off = (dh - 1) * W + (dw - 1)
                # tap[ci, m] = x[ci, m + off]  (np.roll convention: roll by -off)
                tap = x if off == 0 else pltpu.roll(x, (-off) % M, axis=1)

                conds = []
                if dh == 0:
                    conds.append(h_idx >= 1)             # needs row above
                elif dh == K - 1:
                    conds.append(h_idx <= H - 2)         # needs row below
                if dw == 0:
                    conds.append(w_idx >= 1)             # needs col left
                elif dw == K - 1:
                    conds.append(w_idx <= W - 2)         # needs col right
                if conds:
                    c = conds[0]
                    for extra in conds[1:]:
                        c = jnp.logical_and(c, extra)
                    # (1, M) 0/1 mask, sublane-broadcast multiply (VPU-cheap).
                    tap = tap * jnp.where(c, 1.0, 0.0).astype(tap.dtype)

                acc = acc + jnp.dot(w_ref[dh * K + dw], tap,
                                    preferred_element_type=jnp.float32)

        # Training-mode BatchNorm over M = N*H*W, fused scale/shift epilogue.
        inv_m = 1.0 / M
        stacked = jnp.concatenate([acc, acc * acc], axis=0)   # (2*Cout, M)
        sums = jnp.sum(stacked, axis=1, keepdims=True)        # one XLU reduce pass
        mean = sums[:Cout] * inv_m                            # (Cout, 1)
        meansq = sums[Cout:] * inv_m                          # (Cout, 1)
        var = jnp.maximum(meansq - mean * mean, 0.0)          # cancellation guard
        inv = jax.lax.rsqrt(var + EPS)

        p = p_ref[...]                                        # (Cout, 2)
        scale = inv * p[:, 0:1]                               # gamma / sqrt(var+eps)
        shift = p[:, 1:2] - mean * scale                      # beta - mean*scale
        o = acc * scale + shift                               # (Cout, M)

        # Store directly in (N, Cout, HW) layout: 128-aligned lane slices,
        # unmasked lane-dense stores, no output transpose needed outside.
        for n in range(N):
            o_ref[n] = o[:, n * HW:(n + 1) * HW]

    return kernel


@jax.jit
def dummy_model_forward(x_nchw, conv_w, conv_b, bn_gamma, bn_beta):
    """Forward of DummyModel in training mode (batch stats, biased variance).

    conv_b is accepted for parameter parity with the PyTorch module but not fed
    to the kernel: training-mode BN's batch-mean subtraction cancels a constant
    per-channel bias exactly (verified against the reference below).
    """
    del conv_b
    N, Cin, H, W = x_nchw.shape
    Cout, _, K, _ = conv_w.shape
    HW = H * W
    M = N * HW

    # Only real glue: one small transpose of the raw input to channel-major with
    # all pixels flattened onto the lane axis.  No padding, no im2col, no bf16.
    x_t = jnp.transpose(x_nchw, (1, 0, 2, 3)).reshape(Cin, M).astype(jnp.float32)

    # Per-pixel (h, w) indices for the in-kernel boundary masks (tiny constant).
    m_idx = jnp.arange(M, dtype=jnp.int32)
    hw_idx = jnp.stack([(m_idx // W) % H, m_idx % W], axis=0)        # (2, M)

    # Conv taps as nine (Cout, Cin) matrices: (Cout,Cin,KH,KW) -> (KH*KW,Cout,Cin).
    w_taps = jnp.transpose(conv_w, (2, 3, 0, 1)).reshape(K * K, Cout, Cin)
    w_taps = w_taps.astype(jnp.float32)

    # gamma/beta packed into one tiny (Cout, 2) array -> a single small DMA.
    params = jnp.stack([bn_gamma, bn_beta], axis=1).astype(jnp.float32)

    kernel = _make_kernel(N, Cin, Cout, H, W, K)

    out = pl.pallas_call(
        kernel,
        out_shape=jax.ShapeDtypeStruct((N, Cout, HW), jnp.float32),
        grid_spec=pltpu.PrefetchScalarGridSpec(
            num_scalar_prefetch=0,
            grid=(1,),
            in_specs=[
                pl.BlockSpec((Cin, M), lambda i: (0, 0)),
                pl.BlockSpec((2, M), lambda i: (0, 0)),
                pl.BlockSpec((K * K, Cout, Cin), lambda i: (0, 0, 0)),
                pl.BlockSpec((Cout, 2), lambda i: (0, 0)),
            ],
            out_specs=pl.BlockSpec((N, Cout, HW), lambda i: (0, 0, 0)),
        ),
        compiler_params=pltpu.CompilerParams(
            dimension_semantics=("arbitrary",)),
    )(x_t, hw_idx, w_taps, params)

    # Free reshape: (N, Cout, H*W) -> (N, Cout, H, W), i.e. NCHW like PyTorch.
    return out.reshape(N, Cout, H, W)


if __name__ == "__main__":
    N, Cin, H, W = 2, 4, 16, 16
    Cout, K = 8, 3

    key = jax.random.PRNGKey(0)
    kx, kw, kb = jax.random.split(key, 3)

    x = jax.random.normal(kx, (N, Cin, H, W), dtype=jnp.float32)
    conv_w = 0.1 * jax.random.normal(kw, (Cout, Cin, K, K), dtype=jnp.float32)
    conv_b = 0.1 * jax.random.normal(kb, (Cout,), dtype=jnp.float32)
    bn_gamma = jnp.ones((Cout,), dtype=jnp.float32)   # PyTorch BN default: weight=1
    bn_beta = jnp.zeros((Cout,), dtype=jnp.float32)   # PyTorch BN default: bias=0

    out = dummy_model_forward(x, conv_w, conv_b, bn_gamma, bn_beta)
    out = jax.block_until_ready(out)

    assert out.shape == (N, Cout, H, W), out.shape
    assert bool(jnp.all(jnp.isfinite(out)))

    # training-mode BN with gamma=1, beta=0 => per-channel batch mean ~ 0
    ch_mean = jnp.mean(out, axis=(0, 2, 3))
    assert bool(jnp.all(jnp.abs(ch_mean) < 1e-4)), ch_mean

    # pure-JAX reference: f32 conv (+ bias, cancelled by training-mode BN) + BN.
    y_ref = jax.lax.conv_general_dilated(
        x, conv_w, window_strides=(1, 1), padding="SAME",
        dimension_numbers=("NCHW", "OIHW", "NCHW")) + conv_b.reshape(1, Cout, 1, 1)
    mu = jnp.mean(y_ref, axis=(0, 2, 3), keepdims=True)
    var = jnp.mean((y_ref - mu) ** 2, axis=(0, 2, 3), keepdims=True)
    ref = (y_ref - mu) * jax.lax.rsqrt(var + EPS) * bn_gamma.reshape(1, Cout, 1, 1) \
        + bn_beta.reshape(1, Cout, 1, 1)
    max_err = float(jnp.max(jnp.abs(out - ref)))
    assert max_err < 2e-3, max_err

    print("KERNEL_OK")
</pallas_src>

<mosaic_0001>
module attributes {stable_mosaic.version = 11 : i64} {
  func.func @kernel(%arg0: i32, %arg1: memref<4x512xf32, #tpu.memory_space<vmem>>, %arg2: memref<2x512xi32, #tpu.memory_space<vmem>>, %arg3: memref<9x8x4xf32, #tpu.memory_space<vmem>>, %arg4: memref<8x2xf32, #tpu.memory_space<vmem>>, %arg5: memref<2x8x256xf32, #tpu.memory_space<vmem>>) attributes {dimension_semantics = [#tpu.dimension_semantics<arbitrary>], iteration_bounds = array<i64: 1>, scalar_prefetch = 0 : i64, scratch_operands = 0 : i64, tpu.core_type = #tpu.core_type<tc>, window_params = [{pipeline_mode = #tpu.pipeline_mode<synchronous>, transform_indices = @transform_0, window_bounds = array<i64: 4, 512>}, {pipeline_mode = #tpu.pipeline_mode<synchronous>, transform_indices = @transform_1, window_bounds = array<i64: 2, 512>}, {pipeline_mode = #tpu.pipeline_mode<synchronous>, transform_indices = @transform_2, window_bounds = array<i64: 9, 8, 4>}, {pipeline_mode = #tpu.pipeline_mode<synchronous>, transform_indices = @transform_3, window_bounds = array<i64: 8, 2>}, {pipeline_mode = #tpu.pipeline_mode<synchronous>, transform_indices = @transform_4, window_bounds = array<i64: 2, 8, 256>}]} {
    %c0 = arith.constant 0 : index
    %c0_0 = arith.constant 0 : index
    %0 = vector.load %arg1[%c0, %c0_0] : memref<4x512xf32, #tpu.memory_space<vmem>>, vector<4x512xf32>
    %c0_1 = arith.constant 0 : index
    %c0_2 = arith.constant 0 : index
    %1 = vector.load %arg2[%c0_1, %c0_2] : memref<2x512xi32, #tpu.memory_space<vmem>>, vector<1x512xi32>
    %c1 = arith.constant 1 : index
    %c0_3 = arith.constant 0 : index
    %2 = vector.load %arg2[%c1, %c0_3] : memref<2x512xi32, #tpu.memory_space<vmem>>, vector<1x512xi32>
    %cst = arith.constant 0.000000e+00 : f32
    %3 = vector.broadcast %cst : f32 to vector<8x512xf32>
    %c17_i32 = arith.constant 17 : i32
    %4 = tpu.dynamic_rotate %0 by %c17_i32 dim 1 : vector<4x512xf32>, i32 -> vector<4x512xf32>
    %c1_i32 = arith.constant 1 : i32
    %5 = vector.broadcast %c1_i32 : i32 to vector<1x512xi32>
    %6 = arith.cmpi sge, %1, %5 : vector<1x512xi32>
    %c1_i32_4 = arith.constant 1 : i32
    %7 = vector.broadcast %c1_i32_4 : i32 to vector<1x512xi32>
    %8 = arith.cmpi sge, %2, %7 : vector<1x512xi32>
    %9 = arith.andi %6, %8 : vector<1x512xi1>
    %cst_5 = arith.constant 1.000000e+00 : f32
    %cst_6 = arith.constant 0.000000e+00 : f32
    %10 = vector.broadcast %cst_5 : f32 to vector<1x512xf32>
    %11 = vector.broadcast %cst_6 : f32 to vector<1x512xf32>
    %12 = arith.select %9, %10, %11 : vector<1x512xi1>, vector<1x512xf32>
    %13 = vector.broadcast %12 : vector<1x512xf32> to vector<4x512xf32>
    %14 = arith.mulf %4, %13 : vector<4x512xf32>
    %c0_7 = arith.constant 0 : index
    %c0_8 = arith.constant 0 : index
    %c0_9 = arith.constant 0 : index
    %15 = vector.load %arg3[%c0_7, %c0_8, %c0_9] : memref<9x8x4xf32, #tpu.memory_space<vmem>>, vector<1x8x4xf32>
    %16 = vector.shape_cast %15 : vector<1x8x4xf32> to vector<8x4xf32>
    %cst_10 = arith.constant dense<0.000000e+00> : vector<8x512xf32>
    %17 = tpu.matmul %16, %14, %cst_10 {dimension_numbers = #tpu.dot_dimension_numbers<[1], [0], [0], [1], [0, 0, 1, 1], [], []>} : vector<8x4xf32>, vector<4x512xf32>, vector<8x512xf32> -> vector<8x512xf32>
    %18 = arith.addf %3, %17 : vector<8x512xf32>
    %c16_i32 = arith.constant 16 : i32
    %19 = tpu.dynamic_rotate %0 by %c16_i32 dim 1 : vector<4x512xf32>, i32 -> vector<4x512xf32>
    %c1_i32_11 = arith.constant 1 : i32
    %20 = vector.broadcast %c1_i32_11 : i32 to vector<1x512xi32>
    %21 = arith.cmpi sge, %1, %20 : vector<1x512xi32>
    %cst_12 = arith.constant 1.000000e+00 : f32
    %cst_13 = arith.constant 0.000000e+00 : f32
    %22 = vector.broadcast %cst_12 : f32 to vector<1x512xf32>
    %23 = vector.broadcast %cst_13 : f32 to vector<1x512xf32>
    %24 = arith.select %21, %22, %23 : vector<1x512xi1>, vector<1x512xf32>
    %25 = vector.broadcast %24 : vector<1x512xf32> to vector<4x512xf32>
    %26 = arith.mulf %19, %25 : vector<4x512xf32>
    %c1_14 = arith.constant 1 : index
    %c0_15 = arith.constant 0 : index
    %c0_16 = arith.constant 0 : index
    %27 = vector.load %arg3[%c1_14, %c0_15, %c0_16] : memref<9x8x4xf32, #tpu.memory_space<vmem>>, vector<1x8x4xf32>
    %28 = vector.shape_cast %27 : vector<1x8x4xf32> to vector<8x4xf32>
    %cst_17 = arith.constant dense<0.000000e+00> : vector<8x512xf32>
    %29 = tpu.matmul %28, %26, %cst_17 {dimension_numbers = #tpu.dot_dimension_numbers<[1], [0], [0], [1], [0, 0, 1, 1], [], []>} : vector<8x4xf32>, vector<4x512xf32>, vector<8x512xf32> -> vector<8x512xf32>
    %30 = arith.addf %18, %29 : vector<8x512xf32>
    %c15_i32 = arith.constant 15 : i32
    %31 = tpu.dynamic_rotate %0 by %c15_i32 dim 1 : vector<4x512xf32>, i32 -> vector<4x512xf32>
    %c1_i32_18 = arith.constant 1 : i32
    %32 = vector.broadcast %c1_i32_18 : i32 to vector<1x512xi32>
    %33 = arith.cmpi sge, %1, %32 : vector<1x512xi32>
    %c14_i32 = arith.constant 14 : i32
    %34 = vector.broadcast %c14_i32 : i32 to vector<1x512xi32>
    %35 = arith.cmpi sle, %2, %34 : vector<1x512xi32>
    %36 = arith.andi %33, %35 : vector<1x512xi1>
    %cst_19 = arith.constant 1.000000e+00 : f32
    %cst_20 = arith.constant 0.000000e+00 : f32
    %37 = vector.broadcast %cst_19 : f32 to vector<1x512xf32>
    %38 = vector.broadcast %cst_20 : f32 to vector<1x512xf32>
    %39 = arith.select %36, %37, %38 : vector<1x512xi1>, vector<1x512xf32>
    %40 = vector.broadcast %39 : vector<1x512xf32> to vector<4x512xf32>
    %41 = arith.mulf %31, %40 : vector<4x512xf32>
    %c2 = arith.constant 2 : index
    %c0_21 = arith.constant 0 : index
    %c0_22 = arith.constant 0 : index
    %42 = vector.load %arg3[%c2, %c0_21, %c0_22] : memref<9x8x4xf32, #tpu.memory_space<vmem>>, vector<1x8x4xf32>
    %43 = vector.shape_cast %42 : vector<1x8x4xf32> to vector<8x4xf32>
    %cst_23 = arith.constant dense<0.000000e+00> : vector<8x512xf32>
    %44 = tpu.matmul %43, %41, %cst_23 {dimension_numbers = #tpu.dot_dimension_numbers<[1], [0], [0], [1], [0, 0, 1, 1], [], []>} : vector<8x4xf32>, vector<4x512xf32>, vector<8x512xf32> -> vector<8x512xf32>
    %45 = arith.addf %30, %44 : vector<8x512xf32>
    %c1_i32_24 = arith.constant 1 : i32
    %46 = tpu.dynamic_rotate %0 by %c1_i32_24 dim 1 : vector<4x512xf32>, i32 -> vector<4x512xf32>
    %c1_i32_25 = arith.constant 1 : i32
    %47 = vector.broadcast %c1_i32_25 : i32 to vector<1x512xi32>
    %48 = arith.cmpi sge, %2, %47 : vector<1x512xi32>
    %cst_26 = arith.constant 1.000000e+00 : f32
    %cst_27 = arith.constant 0.000000e+00 : f32
    %49 = vector.broadcast %cst_26 : f32 to vector<1x512xf32>
    %50 = vector.broadcast %cst_27 : f32 to vector<1x512xf32>
    %51 = arith.select %48, %49, %50 : vector<1x512xi1>, vector<1x512xf32>
    %52 = vector.broadcast %51 : vector<1x512xf32> to vector<4x512xf32>
    %53 = arith.mulf %46, %52 : vector<4x512xf32>
    %c3 = arith.constant 3 : index
    %c0_28 = arith.constant 0 : index
    %c0_29 = arith.constant 0 : index
    %54 = vector.load %arg3[%c3, %c0_28, %c0_29] : memref<9x8x4xf32, #tpu.memory_space<vmem>>, vector<1x8x4xf32>
    %55 = vector.shape_cast %54 : vector<1x8x4xf32> to vector<8x4xf32>
    %cst_30 = arith.constant dense<0.000000e+00> : vector<8x512xf32>
    %56 = tpu.matmul %55, %53, %cst_30 {dimension_numbers = #tpu.dot_dimension_numbers<[1], [0], [0], [1], [0, 0, 1, 1], [], []>} : vector<8x4xf32>, vector<4x512xf32>, vector<8x512xf32> -> vector<8x512xf32>
    %57 = arith.addf %45, %56 : vector<8x512xf32>
    %c4 = arith.constant 4 : index
    %c0_31 = arith.constant 0 : index
    %c0_32 = arith.constant 0 : index
    %58 = vector.load %arg3[%c4, %c0_31, %c0_32] : memref<9x8x4xf32, #tpu.memory_space<vmem>>, vector<1x8x4xf32>
    %59 = vector.shape_cast %58 : vector<1x8x4xf32> to vector<8x4xf32>
    %cst_33 = arith.constant dense<0.000000e+00> : vector<8x512xf32>
    %60 = tpu.matmul %59, %0, %cst_33 {dimension_numbers = #tpu.dot_dimension_numbers<[1], [0], [0], [1], [0, 0, 1, 1], [], []>} : vector<8x4xf32>, vector<4x512xf32>, vector<8x512xf32> -> vector<8x512xf32>
    %61 = arith.addf %57, %60 : vector<8x512xf32>
    %c511_i32 = arith.constant 511 : i32
    %62 = tpu.dynamic_rotate %0 by %c511_i32 dim 1 : vector<4x512xf32>, i32 -> vector<4x512xf32>
    %c14_i32_34 = arith.constant 14 : i32
    %63 = vector.broadcast %c14_i32_34 : i32 to vector<1x512xi32>
    %64 = arith.cmpi sle, %2, %63 : vector<1x512xi32>
    %cst_35 = arith.constant 1.000000e+00 : f32
    %cst_36 = arith.constant 0.000000e+00 : f32
    %65 = vector.broadcast %cst_35 : f32 to vector<1x512xf32>
    %66 = vector.broadcast %cst_36 : f32 to vector<1x512xf32>
    %67 = arith.select %64, %65, %66 : vector<1x512xi1>, vector<1x512xf32>
    %68 = vector.broadcast %67 : vector<1x512xf32> to vector<4x512xf32>
    %69 = arith.mulf %62, %68 : vector<4x512xf32>
    %c5 = arith.constant 5 : index
    %c0_37 = arith.constant 0 : index
    %c0_38 = arith.constant 0 : index
    %70 = vector.load %arg3[%c5, %c0_37, %c0_38] : memref<9x8x4xf32, #tpu.memory_space<vmem>>, vector<1x8x4xf32>
    %71 = vector.shape_cast %70 : vector<1x8x4xf32> to vector<8x4xf32>
    %cst_39 = arith.constant dense<0.000000e+00> : vector<8x512xf32>
    %72 = tpu.matmul %71, %69, %cst_39 {dimension_numbers = #tpu.dot_dimension_numbers<[1], [0], [0], [1], [0, 0, 1, 1], [], []>} : vector<8x4xf32>, vector<4x512xf32>, vector<8x512xf32> -> vector<8x512xf32>
    %73 = arith.addf %61, %72 : vector<8x512xf32>
    %c497_i32 = arith.constant 497 : i32
    %74 = tpu.dynamic_rotate %0 by %c497_i32 dim 1 : vector<4x512xf32>, i32 -> vector<4x512xf32>
    %c14_i32_40 = arith.constant 14 : i32
    %75 = vector.broadcast %c14_i32_40 : i32 to vector<1x512xi32>
    %76 = arith.cmpi sle, %1, %75 : vector<1x512xi32>
    %c1_i32_41 = arith.constant 1 : i32
    %77 = vector.broadcast %c1_i32_41 : i32 to vector<1x512xi32>
    %78 = arith.cmpi sge, %2, %77 : vector<1x512xi32>
    %79 = arith.andi %76, %78 : vector<1x512xi1>
    %cst_42 = arith.constant 1.000000e+00 : f32
    %cst_43 = arith.constant 0.000000e+00 : f32
    %80 = vector.broadcast %cst_42 : f32 to vector<1x512xf32>
    %81 = vector.broadcast %cst_43 : f32 to vector<1x512xf32>
    %82 = arith.select %79, %80, %81 : vector<1x512xi1>, vector<1x512xf32>
    %83 = vector.broadcast %82 : vector<1x512xf32> to vector<4x512xf32>
    %84 = arith.mulf %74, %83 : vector<4x512xf32>
    %c6 = arith.constant 6 : index
    %c0_44 = arith.constant 0 : index
    %c0_45 = arith.constant 0 : index
    %85 = vector.load %arg3[%c6, %c0_44, %c0_45] : memref<9x8x4xf32, #tpu.memory_space<vmem>>, vector<1x8x4xf32>
    %86 = vector.shape_cast %85 : vector<1x8x4xf32> to vector<8x4xf32>
    %cst_46 = arith.constant dense<0.000000e+00> : vector<8x512xf32>
    %87 = tpu.matmul %86, %84, %cst_46 {dimension_numbers = #tpu.dot_dimension_numbers<[1], [0], [0], [1], [0, 0, 1, 1], [], []>} : vector<8x4xf32>, vector<4x512xf32>, vector<8x512xf32> -> vector<8x512xf32>
    %88 = arith.addf %73, %87 : vector<8x512xf32>
    %c496_i32 = arith.constant 496 : i32
    %89 = tpu.dynamic_rotate %0 by %c496_i32 dim 1 : vector<4x512xf32>, i32 -> vector<4x512xf32>
    %c14_i32_47 = arith.constant 14 : i32
    %90 = vector.broadcast %c14_i32_47 : i32 to vector<1x512xi32>
    %91 = arith.cmpi sle, %1, %90 : vector<1x512xi32>
    %cst_48 = arith.constant 1.000000e+00 : f32
    %cst_49 = arith.constant 0.000000e+00 : f32
    %92 = vector.broadcast %cst_48 : f32 to vector<1x512xf32>
    %93 = vector.broadcast %cst_49 : f32 to vector<1x512xf32>
    %94 = arith.select %91, %92, %93 : vector<1x512xi1>, vector<1x512xf32>
    %95 = vector.broadcast %94 : vector<1x512xf32> to vector<4x512xf32>
    %96 = arith.mulf %89, %95 : vector<4x512xf32>
    %c7 = arith.constant 7 : index
    %c0_50 = arith.constant 0 : index
    %c0_51 = arith.constant 0 : index
    %97 = vector.load %arg3[%c7, %c0_50, %c0_51] : memref<9x8x4xf32, #tpu.memory_space<vmem>>, vector<1x8x4xf32>
    %98 = vector.shape_cast %97 : vector<1x8x4xf32> to vector<8x4xf32>
    %cst_52 = arith.constant dense<0.000000e+00> : vector<8x512xf32>
    %99 = tpu.matmul %98, %96, %cst_52 {dimension_numbers = #tpu.dot_dimension_numbers<[1], [0], [0], [1], [0, 0, 1, 1], [], []>} : vector<8x4xf32>, vector<4x512xf32>, vector<8x512xf32> -> vector<8x512xf32>
    %100 = arith.addf %88, %99 : vector<8x512xf32>
    %c495_i32 = arith.constant 495 : i32
    %101 = tpu.dynamic_rotate %0 by %c495_i32 dim 1 : vector<4x512xf32>, i32 -> vector<4x512xf32>
    %c14_i32_53 = arith.constant 14 : i32
    %102 = vector.broadcast %c14_i32_53 : i32 to vector<1x512xi32>
    %103 = arith.cmpi sle, %1, %102 : vector<1x512xi32>
    %c14_i32_54 = arith.constant 14 : i32
    %104 = vector.broadcast %c14_i32_54 : i32 to vector<1x512xi32>
    %105 = arith.cmpi sle, %2, %104 : vector<1x512xi32>
    %106 = arith.andi %103, %105 : vector<1x512xi1>
    %cst_55 = arith.constant 1.000000e+00 : f32
    %cst_56 = arith.constant 0.000000e+00 : f32
    %107 = vector.broadcast %cst_55 : f32 to vector<1x512xf32>
    %108 = vector.broadcast %cst_56 : f32 to vector<1x512xf32>
    %109 = arith.select %106, %107, %108 : vector<1x512xi1>, vector<1x512xf32>
    %110 = vector.broadcast %109 : vector<1x512xf32> to vector<4x512xf32>
    %111 = arith.mulf %101, %110 : vector<4x512xf32>
    %c8 = arith.constant 8 : index
    %c0_57 = arith.constant 0 : index
    %c0_58 = arith.constant 0 : index
    %112 = vector.load %arg3[%c8, %c0_57, %c0_58] : memref<9x8x4xf32, #tpu.memory_space<vmem>>, vector<1x8x4xf32>
    %113 = vector.shape_cast %112 : vector<1x8x4xf32> to vector<8x4xf32>
    %cst_59 = arith.constant dense<0.000000e+00> : vector<8x512xf32>
    %114 = tpu.matmul %113, %111, %cst_59 {dimension_numbers = #tpu.dot_dimension_numbers<[1], [0], [0], [1], [0, 0, 1, 1], [], []>} : vector<8x4xf32>, vector<4x512xf32>, vector<8x512xf32> -> vector<8x512xf32>
    %115 = arith.addf %100, %114 : vector<8x512xf32>
    %116 = arith.mulf %115, %115 : vector<8x512xf32>
    %117 = tpu.concatenate %115, %116 in 0 : vector<8x512xf32>, vector<8x512xf32> -> vector<16x512xf32>
    %cst_60 = arith.constant dense<0.000000e+00> : vector<16xf32>
    %118 = vector.multi_reduction <add>, %117, %cst_60 [1] : vector<16x512xf32> to vector<16xf32>
    %119 = vector.shape_cast %118 : vector<16xf32> to vector<16x1xf32>
    %120 = vector.extract_strided_slice %119 {offsets = [0, 0], sizes = [8, 1], strides = [1, 1]} : vector<16x1xf32> to vector<8x1xf32>
    %cst_61 = arith.constant 0.001953125 : f32
    %121 = vector.broadcast %cst_61 : f32 to vector<8x1xf32>
    %122 = arith.mulf %120, %121 : vector<8x1xf32>
    %123 = vector.extract_strided_slice %119 {offsets = [8, 0], sizes = [8, 1], strides = [1, 1]} : vector<16x1xf32> to vector<8x1xf32>
    %cst_62 = arith.constant 0.001953125 : f32
    %124 = vector.broadcast %cst_62 : f32 to vector<8x1xf32>
    %125 = arith.mulf %123, %124 : vector<8x1xf32>
    %126 = arith.mulf %122, %122 : vector<8x1xf32>
    %127 = arith.subf %125, %126 : vector<8x1xf32>
    %cst_63 = arith.constant 0.000000e+00 : f32
    %128 = vector.broadcast %cst_63 : f32 to vector<8x1xf32>
    %129 = arith.maximumf %127, %128 : vector<8x1xf32>
    %cst_64 = arith.constant 9.99999974E-6 : f32
    %130 = vector.broadcast %cst_64 : f32 to vector<8x1xf32>
    %131 = arith.addf %129, %130 : vector<8x1xf32>
    %132 = math.rsqrt %131 : vector<8x1xf32>
    %c0_65 = arith.constant 0 : index
    %c0_66 = arith.constant 0 : index
    %133 = vector.load %arg4[%c0_65, %c0_66] : memref<8x2xf32, #tpu.memory_space<vmem>>, vector<8x2xf32>
    %134 = vector.extract_strided_slice %133 {offsets = [0, 0], sizes = [8, 1], strides = [1, 1]} : vector<8x2xf32> to vector<8x1xf32>
    %135 = arith.mulf %132, %134 : vector<8x1xf32>
    %136 = vector.extract_strided_slice %133 {offsets = [0, 1], sizes = [8, 1], strides = [1, 1]} : vector<8x2xf32> to vector<8x1xf32>
    %137 = arith.mulf %122, %135 : vector<8x1xf32>
    %138 = arith.subf %136, %137 : vector<8x1xf32>
    %139 = vector.broadcast %135 : vector<8x1xf32> to vector<8x512xf32>
    %140 = arith.mulf %115, %139 : vector<8x512xf32>
    %141 = vector.broadcast %138 : vector<8x1xf32> to vector<8x512xf32>
    %142 = arith.addf %140, %141 : vector<8x512xf32>
    %143 = vector.extract_strided_slice %142 {offsets = [0, 0], sizes = [8, 256], strides = [1, 1]} : vector<8x512xf32> to vector<8x256xf32>
    %c0_67 = arith.constant 0 : index
    %c0_68 = arith.constant 0 : index
    %c0_69 = arith.constant 0 : index
    %144 = vector.load %arg5[%c0_67, %c0_68, %c0_69] : memref<2x8x256xf32, #tpu.memory_space<vmem>>, vector<1x8x256xf32>
    %145 = vector.shape_cast %144 : vector<1x8x256xf32> to vector<8x256xf32>
    %146 = vector.shape_cast %143 : vector<8x256xf32> to vector<1x8x256xf32>
    tpu.vector_store %arg5[%c0_67, %c0_68, %c0_69], %146 {strides = array<i32>} : memref<2x8x256xf32, #tpu.memory_space<vmem>>, vector<1x8x256xf32>,
    %147 = vector.extract_strided_slice %142 {offsets = [0, 256], sizes = [8, 256], strides = [1, 1]} : vector<8x512xf32> to vector<8x256xf32>
    %c1_70 = arith.constant 1 : index
    %c0_71 = arith.constant 0 : index
    %c0_72 = arith.constant 0 : index
    %148 = vector.load %arg5[%c1_70, %c0_71, %c0_72] : memref<2x8x256xf32, #tpu.memory_space<vmem>>, vector<1x8x256xf32>
    %149 = vector.shape_cast %148 : vector<1x8x256xf32> to vector<8x256xf32>
    %150 = vector.shape_cast %147 : vector<8x256xf32> to vector<1x8x256xf32>
    tpu.vector_store %arg5[%c1_70, %c0_71, %c0_72], %150 {strides = array<i32>} : memref<2x8x256xf32, #tpu.memory_space<vmem>>, vector<1x8x256xf32>,
    return
  }
  func.func @transform_0(%arg0: i32) -> (i32, i32) {
    %c0_i32 = arith.constant 0 : i32
    %c0_i32_0 = arith.constant 0 : i32
    %c0_i32_1 = arith.constant 0 : i32
    return %c0_i32, %c0_i32_0 : i32, i32
  }
  func.func @transform_1(%arg0: i32) -> (i32, i32) {
    %c0_i32 = arith.constant 0 : i32
    %c0_i32_0 = arith.constant 0 : i32
    %c0_i32_1 = arith.constant 0 : i32
    return %c0_i32, %c0_i32_0 : i32, i32
  }
  func.func @transform_2(%arg0: i32) -> (i32, i32, i32) {
    %c0_i32 = arith.constant 0 : i32
    %c0_i32_0 = arith.constant 0 : i32
    %c0_i32_1 = arith.constant 0 : i32
    %c0_i32_2 = arith.constant 0 : i32
    return %c0_i32, %c0_i32_0, %c0_i32_1 : i32, i32, i32
  }
  func.func @transform_3(%arg0: i32) -> (i32, i32) {
    %c0_i32 = arith.constant 0 : i32
    %c0_i32_0 = arith.constant 0 : i32
    %c0_i32_1 = arith.constant 0 : i32
    return %c0_i32, %c0_i32_0 : i32, i32
  }
  func.func @transform_4(%arg0: i32) -> (i32, i32, i32) {
    %c0_i32 = arith.constant 0 : i32
    %c0_i32_0 = arith.constant 0 : i32
    %c0_i32_1 = arith.constant 0 : i32
    %c0_i32_2 = arith.constant 0 : i32
    return %c0_i32, %c0_i32_0, %c0_i32_1 : i32, i32, i32
  }
}

</mosaic_0001>

<llo_original>
// kernel: dummy_model_forward.1
$region0: #{dummy_model_forward.1}
  #allocation0 [shape = 'u32[]', space=smem, size = 0x4, offset = 0x4, fixed_abs, tag = 'smem constant byte address 0x4 - core index']
  #allocation1 [shape = 'u32[72,128]{1,0:T(1,128)}', space=vmem, size = 0x9000, scoped, tag = 'internal scratch']
  %s0 = inlined_call_operand.vmem [shape: f32[4,512], index: 0, kind: input, shape index: {}]
  %s1 = inlined_call_operand.vmem [shape: s32[2,512], index: 1, kind: input, shape index: {}]
  %s2 = inlined_call_operand.vmem [shape: f32[9,8,4], index: 2, kind: input, shape index: {}]
  %s3 = inlined_call_operand.vmem [shape: f32[8,2], index: 3, kind: input, shape index: {}]
  %s4 = inlined_call_operand.vmem [shape: f32[2,8,256], index: 4, kind: output, shape index: {}]
  %s5 = sld [smem:[#allocation0]]
  $region26: #{dummy_model_forward.1} parent=0
    _
  %s7 = ssub.s32 1, %s5
  %s8 = scalar_select 0, %s7, %s5
  // Predicated region
  $region2: #{dummy_model_forward.1} parent=0 // pred_check
    _
  $region3: #{dummy_model_forward.1} parent=0 // pred_check_branch
    %10 = sbr.rel (0) target = $region5
  $region4: #{dummy_model_forward.1} parent=0 // pred_region
    _
  $region5: #{dummy_model_forward.1} parent=0 // pred_fallthru
    _
  // Predicated region
  $region6: #{dummy_model_forward.1} parent=0 // pred_check
    _
  $region7: #{dummy_model_forward.1} parent=0 // pred_check_branch
    %12 = sbr.rel (0) target = $region9
  $region8: #{dummy_model_forward.1} parent=0 // pred_region
    _
  $region9: #{dummy_model_forward.1} parent=0 // pred_fallthru
    _
  // Predicated region
  $region10: #{dummy_model_forward.1} parent=0 // pred_check
    _
  $region11: #{dummy_model_forward.1} parent=0 // pred_check_branch
    %14 = sbr.rel (0) target = $region13
  $region12: #{dummy_model_forward.1} parent=0 // pred_region
    _
  $region13: #{dummy_model_forward.1} parent=0 // pred_fallthru
    _
  // Predicated region
  $region14: #{dummy_model_forward.1} parent=0 // pred_check
    _
  $region15: #{dummy_model_forward.1} parent=0 // pred_check_branch
    %16 = sbr.rel (0) target = $region17
  $region16: #{dummy_model_forward.1} parent=0 // pred_region
    _
  $region17: #{dummy_model_forward.1} parent=0 // pred_fallthru
    _
  %v17 = vld [vmem:[%s0] sm:$0xff]
  %v18 = vld [vmem:[%s0 + $0x8] sm:$0xff]
  %v19 = vld [vmem:[%s1] ss:$2 sm:$0xf]
  %s20 = scalar_lea.vmem %s1, 1
  %v21 = vld [vmem:[%s20] ss:$2 sm:$0xf]
  %24 = vst [vmem:[#allocation1] ss:$2 sm:$0xff] %v17
  %s25 = scalar_lea.vmem [#allocation1], 16
  %26 = vst [vmem:[%s25] ss:$2 sm:$0xff] %v18
  %v27 = vld.sshfl [vmem:[#allocation1] sm:$0xff pattern:$0x75316420]
  %v28 = vld.sshfl [vmem:[#allocation1 + $0x8] sm:$0xff pattern:$0x75316420]
  %v29 = vld.sshfl [vmem:[#allocation1 + $0x10] sm:$0xff pattern:$0x75316420]
  %v30 = vld.sshfl [vmem:[#allocation1 + $0x18] sm:$0xff pattern:$0x75316420]
  %35 = vrot.lane.b32.xlu0 %v27, 17
  %v36 = vpop.permute.xlu0 %35
  %37 = vrot.lane.b32.xlu0 %v28, 17
  %v38 = vpop.permute.xlu0 %37
  %39 = vrot.lane.b32.xlu0 %v29, 17
  %v40 = vpop.permute.xlu0 %39
  %41 = vrot.lane.b32.xlu0 %v30, 17
  %v42 = vpop.permute.xlu0 %41
  %v43 = vlaneseq
  %v44 = vand.u32 %v43, 127
  %vm45 = vcmp.lt.s32.totalorder %v44, 17
  %v46 = vsel %vm45, %v40, %v42
  %v47 = vsel %vm45, %v38, %v40
  %v48 = vsel %vm45, %v36, %v38
  %v49 = vsel %vm45, %v42, %v36
  %vm50 = vcmp.ge.s32.totalorder %v19, 1
  %vm51 = vcmp.ge.s32.totalorder %v21, 1
  %vm52 = vmand %vm50, %vm51
  %v53 = vsel %vm52, 1.0, 0.0
  %v55 = vperm.slane %v53, 0
  %v56 = vperm.slane %v53, 1
  %v57 = vperm.slane %v53, 2
  %v58 = vperm.slane %v53, 3
  %v63 = vmul.f32 %v49, %v55
  %v64 = vmul.f32 %v48, %v56
  %v65 = vmul.f32 %v47, %v57
  %v66 = vmul.f32 %v46, %v58
  %v67 = vld [vmem:[%s2] sm:$0xff]
  %68 = vst [vmem:[#allocation1] ss:$2 sm:$0xff] %v17
  %s69 = scalar_lea.vmem [#allocation1], 16
  %70 = vst [vmem:[%s69] ss:$2 sm:$0xff] %v18
  %v71 = vld.sshfl [vmem:[#allocation1] sm:$0xff pattern:$0x75316420]
  %v72 = vld.sshfl [vmem:[#allocation1 + $0x8] sm:$0xff pattern:$0x75316420]
  %v73 = vld.sshfl [vmem:[#allocation1 + $0x10] sm:$0xff pattern:$0x75316420]
  %v74 = vld.sshfl [vmem:[#allocation1 + $0x18] sm:$0xff pattern:$0x75316420]
  %79 = vrot.lane.b32.xlu0 %v71, 16
  %v80 = vpop.permute.xlu0 %79
  %81 = vrot.lane.b32.xlu0 %v72, 16
  %v82 = vpop.permute.xlu0 %81
  %83 = vrot.lane.b32.xlu0 %v73, 16
  %v84 = vpop.permute.xlu0 %83
  %85 = vrot.lane.b32.xlu0 %v74, 16
  %v86 = vpop.permute.xlu0 %85
  %vm87 = vcmp.lt.s32.totalorder %v44, 16
  %v88 = vsel %vm87, %v84, %v86
  %v89 = vsel %vm87, %v82, %v84
  %v90 = vsel %vm87, %v80, %v82
  %v91 = vsel %vm87, %v86, %v80
  %v92 = vsel %vm50, 1.0, 0.0
  %v94 = vperm.slane %v92, 0
  %v95 = vperm.slane %v92, 1
  %v96 = vperm.slane %v92, 2
  %v97 = vperm.slane %v92, 3
  %v102 = vmul.f32 %v91, %v94
  %v103 = vmul.f32 %v90, %v95
  %v104 = vmul.f32 %v89, %v96
  %v105 = vmul.f32 %v88, %v97
  %s106 = scalar_lea.vmem %s2, 8
  %v107 = vld [vmem:[%s106] sm:$0xff]
  %vm108 = vcmask 31744
  %v110 = vsel %vm108, %v107, 0
  %vm112 = vcmask 1043456
  %v114 = vsel %vm112, %v102, 0
  %v117 = vsel %vm112, %v103, 0
  %v120 = vsel %vm112, %v104, 0
  %v123 = vsel %vm112, %v105, 0
  %125 = vmatpush.msra.mxu0 0.0
  %126 = vmatpush.msra.mxu0 0.0
  %127 = vmatpush.msra.mxu0 0.0
  %128 = vmatpush.msra.mxu0 0.0
  %129 = vmatpush.msra.mxu0 0.0
  %130 = vmatpush.msra.mxu0 0.0
  %131 = vmatpush.msra.mxu0 0.0
  %132 = vmatpush.msra.mxu0 0.0
  %133 = vmatpush.msra.mxu0 0.0
  %134 = vmatpush.msra.mxu0 0.0
  %135 = vmatpush.msra.mxu0 0.0
  %136 = vmatpush.msra.mxu0 0.0
  %137 = vmatpush.msra.mxu0 0.0
  %138 = vmatpush.msra.mxu0 0.0
  %139 = vmatpush.msra.mxu0 0.0
  %140 = vmatpush.msra.mxu0 %v114
  %141 = vmatmul.f32.gmra.mxu0 %v110
  %v142 = vpop.f32.mrf.mxu0
  %v143 = vadd.f32 0.0, %v142
  %144 = vdwg.mxu0
  %145 = vmatpush.msra.mxu0 0.0
  %146 = vmatpush.msra.mxu0 0.0
  %147 = vmatpush.msra.mxu0 0.0
  %148 = vmatpush.msra.mxu0 0.0
  %149 = vmatpush.msra.mxu0 0.0
  %150 = vmatpush.msra.mxu0 0.0
  %151 = vmatpush.msra.mxu0 0.0
  %152 = vmatpush.msra.mxu0 0.0
  %153 = vmatpush.msra.mxu0 0.0
  %154 = vmatpush.msra.mxu0 0.0
  %155 = vmatpush.msra.mxu0 0.0
  %156 = vmatpush.msra.mxu0 0.0
  %157 = vmatpush.msra.mxu0 0.0
  %158 = vmatpush.msra.mxu0 0.0
  %159 = vmatpush.msra.mxu0 0.0
  %160 = vmatpush.msra.mxu0 %v117
  %161 = vmatmul.f32.gmra.mxu0 %v110
  %v162 = vpop.f32.mrf.mxu0
  %v163 = vadd.f32 0.0, %v162
  %164 = vdwg.mxu0
  %165 = vmatpush.msra.mxu0 0.0
  %166 = vmatpush.msra.mxu0 0.0
  %167 = vmatpush.msra.mxu0 0.0
  %168 = vmatpush.msra.mxu0 0.0
  %169 = vmatpush.msra.mxu0 0.0
  %170 = vmatpush.msra.mxu0 0.0
  %171 = vmatpush.msra.mxu0 0.0
  %172 = vmatpush.msra.mxu0 0.0
  %173 = vmatpush.msra.mxu0 0.0
  %174 = vmatpush.msra.mxu0 0.0
  %175 = vmatpush.msra.mxu0 0.0
  %176 = vmatpush.msra.mxu0 0.0
  %177 = vmatpush.msra.mxu0 0.0
  %178 = vmatpush.msra.mxu0 0.0
  %179 = vmatpush.msra.mxu0 0.0
  %180 = vmatpush.msra.mxu0 %v120
  %181 = vmatmul.f32.gmra.mxu0 %v110
  %v182 = vpop.f32.mrf.mxu0
  %v183 = vadd.f32 0.0, %v182
  %184 = vdwg.mxu0
  %185 = vmatpush.msra.mxu0 0.0
  %186 = vmatpush.msra.mxu0 0.0
  %187 = vmatpush.msra.mxu0 0.0
  %188 = vmatpush.msra.mxu0 0.0
  %189 = vmatpush.msra.mxu0 0.0
  %190 = vmatpush.msra.mxu0 0.0
  %191 = vmatpush.msra.mxu0 0.0
  %192 = vmatpush.msra.mxu0 0.0
  %193 = vmatpush.msra.mxu0 0.0
  %194 = vmatpush.msra.mxu0 0.0
  %195 = vmatpush.msra.mxu0 0.0
  %196 = vmatpush.msra.mxu0 0.0
  %197 = vmatpush.msra.mxu0 0.0
  %198 = vmatpush.msra.mxu0 0.0
  %199 = vmatpush.msra.mxu0 0.0
  %200 = vmatpush.msra.mxu0 %v123
  %201 = vmatmul.f32.gmra.mxu0 %v110
  %v202 = vpop.f32.mrf.mxu0
  %v203 = vadd.f32 0.0, %v202
  %204 = vdwg.mxu0
  %v206 = vsel %vm108, %v67, 0
  %v209 = vsel %vm112, %v63, 0
  %v212 = vsel %vm112, %v64, 0
  %v215 = vsel %vm112, %v65, 0
  %v218 = vsel %vm112, %v66, 0
  %220 = vmatpush.msra.mxu0 0.0
  %221 = vmatpush.msra.mxu0 0.0
  %222 = vmatpush.msra.mxu0 0.0
  %223 = vmatpush.msra.mxu0 0.0
  %224 = vmatpush.msra.mxu0 0.0
  %225 = vmatpush.msra.mxu0 0.0
  %226 = vmatpush.msra.mxu0 0.0
  %227 = vmatpush.msra.mxu0 0.0
  %228 = vmatpush.msra.mxu0 0.0
  %229 = vmatpush.msra.mxu0 0.0
  %230 = vmatpush.msra.mxu0 0.0
  %231 = vmatpush.msra.mxu0 0.0
  %232 = vmatpush.msra.mxu0 0.0
  %233 = vmatpush.msra.mxu0 0.0
  %234 = vmatpush.msra.mxu0 0.0
  %235 = vmatpush.msra.mxu0 %v209
  %236 = vmatmul.f32.gmra.mxu0 %v206
  %v237 = vpop.f32.mrf.mxu0
  %v238 = vadd.f32 %v143, %v237
  %239 = vdwg.mxu0
  %240 = vmatpush.msra.mxu0 0.0
  %241 = vmatpush.msra.mxu0 0.0
  %242 = vmatpush.msra.mxu0 0.0
  %243 = vmatpush.msra.mxu0 0.0
  %244 = vmatpush.msra.mxu0 0.0
  %245 = vmatpush.msra.mxu0 0.0
  %246 = vmatpush.msra.mxu0 0.0
  %247 = vmatpush.msra.mxu0 0.0
  %248 = vmatpush.msra.mxu0 0.0
  %249 = vmatpush.msra.mxu0 0.0
  %250 = vmatpush.msra.mxu0 0.0
  %251 = vmatpush.msra.mxu0 0.0
  %252 = vmatpush.msra.mxu0 0.0
  %253 = vmatpush.msra.mxu0 0.0
  %254 = vmatpush.msra.mxu0 0.0
  %255 = vmatpush.msra.mxu0 %v212
  %256 = vmatmul.f32.gmra.mxu0 %v206
  %v257 = vpop.f32.mrf.mxu0
  %v258 = vadd.f32 %v163, %v257
  %259 = vdwg.mxu0
  %260 = vmatpush.msra.mxu0 0.0
  %261 = vmatpush.msra.mxu0 0.0
  %262 = vmatpush.msra.mxu0 0.0
  %263 = vmatpush.msra.mxu0 0.0
  %264 = vmatpush.msra.mxu0 0.0
  %265 = vmatpush.msra.mxu0 0.0
  %266 = vmatpush.msra.mxu0 0.0
  %267 = vmatpush.msra.mxu0 0.0
  %268 = vmatpush.msra.mxu0 0.0
  %269 = vmatpush.msra.mxu0 0.0
  %270 = vmatpush.msra.mxu0 0.0
  %271 = vmatpush.msra.mxu0 0.0
  %272 = vmatpush.msra.mxu0 0.0
  %273 = vmatpush.msra.mxu0 0.0
  %274 = vmatpush.msra.mxu0 0.0
  %275 = vmatpush.msra.mxu0 %v215
  %276 = vmatmul.f32.gmra.mxu0 %v206
  %v277 = vpop.f32.mrf.mxu0
  %v278 = vadd.f32 %v183, %v277
  %279 = vdwg.mxu0
  %280 = vmatpush.msra.mxu0 0.0
  %281 = vmatpush.msra.mxu0 0.0
  %282 = vmatpush.msra.mxu0 0.0
  %283 = vmatpush.msra.mxu0 0.0
  %284 = vmatpush.msra.mxu0 0.0
  %285 = vmatpush.msra.mxu0 0.0
  %286 = vmatpush.msra.mxu0 0.0
  %287 = vmatpush.msra.mxu0 0.0
  %288 = vmatpush.msra.mxu0 0.0
  %289 = vmatpush.msra.mxu0 0.0
  %290 = vmatpush.msra.mxu0 0.0
  %291 = vmatpush.msra.mxu0 0.0
  %292 = vmatpush.msra.mxu0 0.0
  %293 = vmatpush.msra.mxu0 0.0
  %294 = vmatpush.msra.mxu0 0.0
  %295 = vmatpush.msra.mxu0 %v218
  %296 = vmatmul.f32.gmra.mxu0 %v206
  %v297 = vpop.f32.mrf.mxu0
  %v298 = vadd.f32 %v203, %v297
  %299 = vdwg.mxu0
  %300 = vst [vmem:[#allocation1] ss:$2 sm:$0xff] %v17
  %s301 = scalar_lea.vmem [#allocation1], 16
  %302 = vst [vmem:[%s301] ss:$2 sm:$0xff] %v18
  %v303 = vld.sshfl [vmem:[#allocation1] sm:$0xff pattern:$0x75316420]
  %v304 = vld.sshfl [vmem:[#allocation1 + $0x8] sm:$0xff pattern:$0x75316420]
  %v305 = vld.sshfl [vmem:[#allocation1 + $0x10] sm:$0xff pattern:$0x75316420]
  %v306 = vld.sshfl [vmem:[#allocation1 + $0x18] sm:$0xff pattern:$0x75316420]
  %311 = vrot.lane.b32.xlu0 %v303, 15
  %v312 = vpop.permute.xlu0 %311
  %313 = vrot.lane.b32.xlu0 %v304, 15
  %v314 = vpop.permute.xlu0 %313
  %315 = vrot.lane.b32.xlu0 %v305, 15
  %v316 = vpop.permute.xlu0 %315
  %317 = vrot.lane.b32.xlu0 %v306, 15
  %v318 = vpop.permute.xlu0 %317
  %vm319 = vcmp.lt.s32.totalorder %v44, 15
  %v320 = vsel %vm319, %v316, %v318
  %v321 = vsel %vm319, %v314, %v316
  %v322 = vsel %vm319, %v312, %v314
  %v323 = vsel %vm319, %v318, %v312
  %vm324 = vcmp.le.s32.totalorder %v21, 14
  %vm325 = vmand %vm50, %vm324
  %v326 = vsel %vm325, 1.0, 0.0
  %v328 = vperm.slane %v326, 0
  %v329 = vperm.slane %v326, 1
  %v330 = vperm.slane %v326, 2
  %v331 = vperm.slane %v326, 3
  %v336 = vmul.f32 %v323, %v328
  %v337 = vmul.f32 %v322, %v329
  %v338 = vmul.f32 %v321, %v330
  %v339 = vmul.f32 %v320, %v331
  %s340 = scalar_lea.vmem %s2, 16
  %v341 = vld [vmem:[%s340] sm:$0xff]
  %v343 = vsel %vm108, %v341, 0
  %v346 = vsel %vm112, %v336, 0
  %v349 = vsel %vm112, %v337, 0
  %v352 = vsel %vm112, %v338, 0
  %v355 = vsel %vm112, %v339, 0
  %357 = vmatpush.msra.mxu0 0.0
  %358 = vmatpush.msra.mxu0 0.0
  %359 = vmatpush.msra.mxu0 0.0
  %360 = vmatpush.msra.mxu0 0.0
  %361 = vmatpush.msra.mxu0 0.0
  %362 = vmatpush.msra.mxu0 0.0
  %363 = vmatpush.msra.mxu0 0.0
  %364 = vmatpush.msra.mxu0 0.0
  %365 = vmatpush.msra.mxu0 0.0
  %366 = vmatpush.msra.mxu0 0.0
  %367 = vmatpush.msra.mxu0 0.0
  %368 = vmatpush.msra.mxu0 0.0
  %369 = vmatpush.msra.mxu0 0.0
  %370 = vmatpush.msra.mxu0 0.0
  %371 = vmatpush.msra.mxu0 0.0
  %372 = vmatpush.msra.mxu0 %v346
  %373 = vmatmul.f32.gmra.mxu0 %v343
  %v374 = vpop.f32.mrf.mxu0
  %v375 = vadd.f32 0.0, %v374
  %376 = vdwg.mxu0
  %377 = vmatpush.msra.mxu0 0.0
  %378 = vmatpush.msra.mxu0 0.0
  %379 = vmatpush.msra.mxu0 0.0
  %380 = vmatpush.msra.mxu0 0.0
  %381 = vmatpush.msra.mxu0 0.0
  %382 = vmatpush.msra.mxu0 0.0
  %383 = vmatpush.msra.mxu0 0.0
  %384 = vmatpush.msra.mxu0 0.0
  %385 = vmatpush.msra.mxu0 0.0
  %386 = vmatpush.msra.mxu0 0.0
  %387 = vmatpush.msra.mxu0 0.0
  %388 = vmatpush.msra.mxu0 0.0
  %389 = vmatpush.msra.mxu0 0.0
  %390 = vmatpush.msra.mxu0 0.0
  %391 = vmatpush.msra.mxu0 0.0
  %392 = vmatpush.msra.mxu0 %v349
  %393 = vmatmul.f32.gmra.mxu0 %v343
  %v394 = vpop.f32.mrf.mxu0
  %v395 = vadd.f32 0.0, %v394
  %396 = vdwg.mxu0
  %397 = vmatpush.msra.mxu0 0.0
  %398 = vmatpush.msra.mxu0 0.0
  %399 = vmatpush.msra.mxu0 0.0
  %400 = vmatpush.msra.mxu0 0.0
  %401 = vmatpush.msra.mxu0 0.0
  %402 = vmatpush.msra.mxu0 0.0
  %403 = vmatpush.msra.mxu0 0.0
  %404 = vmatpush.msra.mxu0 0.0
  %405 = vmatpush.msra.mxu0 0.0
  %406 = vmatpush.msra.mxu0 0.0
  %407 = vmatpush.msra.mxu0 0.0
  %408 = vmatpush.msra.mxu0 0.0
  %409 = vmatpush.msra.mxu0 0.0
  %410 = vmatpush.msra.mxu0 0.0
  %411 = vmatpush.msra.mxu0 0.0
  %412 = vmatpush.msra.mxu0 %v352
  %413 = vmatmul.f32.gmra.mxu0 %v343
  %v414 = vpop.f32.mrf.mxu0
  %v415 = vadd.f32 0.0, %v414
  %416 = vdwg.mxu0
  %417 = vmatpush.msra.mxu0 0.0
  %418 = vmatpush.msra.mxu0 0.0
  %419 = vmatpush.msra.mxu0 0.0
  %420 = vmatpush.msra.mxu0 0.0
  %421 = vmatpush.msra.mxu0 0.0
  %422 = vmatpush.msra.mxu0 0.0
  %423 = vmatpush.msra.mxu0 0.0
  %424 = vmatpush.msra.mxu0 0.0
  %425 = vmatpush.msra.mxu0 0.0
  %426 = vmatpush.msra.mxu0 0.0
  %427 = vmatpush.msra.mxu0 0.0
  %428 = vmatpush.msra.mxu0 0.0
  %429 = vmatpush.msra.mxu0 0.0
  %430 = vmatpush.msra.mxu0 0.0
  %431 = vmatpush.msra.mxu0 0.0
  %432 = vmatpush.msra.mxu0 %v355
  %433 = vmatmul.f32.gmra.mxu0 %v343
  %v434 = vpop.f32.mrf.mxu0
  %v435 = vadd.f32 0.0, %v434
  %436 = vdwg.mxu0
  %v437 = vadd.f32 %v238, %v375
  %v438 = vadd.f32 %v258, %v395
  %v439 = vadd.f32 %v278, %v415
  %v440 = vadd.f32 %v298, %v435
  %441 = vst [vmem:[#allocation1] ss:$2 sm:$0xff] %v17
  %s442 = scalar_lea.vmem [#allocation1], 16
  %443 = vst [vmem:[%s442] ss:$2 sm:$0xff] %v18
  %v444 = vld.sshfl [vmem:[#allocation1] sm:$0xff pattern:$0x75316420]
  %v445 = vld.sshfl [vmem:[#allocation1 + $0x8] sm:$0xff pattern:$0x75316420]
  %v446 = vld.sshfl [vmem:[#allocation1 + $0x10] sm:$0xff pattern:$0x75316420]
  %v447 = vld.sshfl [vmem:[#allocation1 + $0x18] sm:$0xff pattern:$0x75316420]
  %452 = vrot.lane.b32.xlu0 %v444, 1
  %v453 = vpop.permute.xlu0 %452
  %454 = vrot.lane.b32.xlu0 %v445, 1
  %v455 = vpop.permute.xlu0 %454
  %456 = vrot.lane.b32.xlu0 %v446, 1
  %v457 = vpop.permute.xlu0 %456
  %458 = vrot.lane.b32.xlu0 %v447, 1
  %v459 = vpop.permute.xlu0 %458
  %vm460 = vcmp.lt.s32.totalorder %v44, 1
  %v461 = vsel %vm460, %v457, %v459
  %v462 = vsel %vm460, %v455, %v457
  %v463 = vsel %vm460, %v453, %v455
  %v464 = vsel %vm460, %v459, %v453
  %v465 = vsel %vm51, 1.0, 0.0
  %v467 = vperm.slane %v465, 0
  %v468 = vperm.slane %v465, 1
  %v469 = vperm.slane %v465, 2
  %v470 = vperm.slane %v465, 3
  %v475 = vmul.f32 %v464, %v467
  %v476 = vmul.f32 %v463, %v468
  %v477 = vmul.f32 %v462, %v469
  %v478 = vmul.f32 %v461, %v470
  %s479 = scalar_lea.vmem %s2, 24
  %v480 = vld [vmem:[%s479] sm:$0xff]
  %v482 = vsel %vm108, %v480, 0
  %v485 = vsel %vm112, %v475, 0
  %v488 = vsel %vm112, %v476, 0
  %v491 = vsel %vm112, %v477, 0
  %v494 = vsel %vm112, %v478, 0
  %496 = vmatpush.msra.mxu0 0.0
  %497 = vmatpush.msra.mxu0 0.0
  %498 = vmatpush.msra.mxu0 0.0
  %499 = vmatpush.msra.mxu0 0.0
  %500 = vmatpush.msra.mxu0 0.0
  %501 = vmatpush.msra.mxu0 0.0
  %502 = vmatpush.msra.mxu0 0.0
  %503 = vmatpush.msra.mxu0 0.0
  %504 = vmatpush.msra.mxu0 0.0
  %505 = vmatpush.msra.mxu0 0.0
  %506 = vmatpush.msra.mxu0 0.0
  %507 = vmatpush.msra.mxu0 0.0
  %508 = vmatpush.msra.mxu0 0.0
  %509 = vmatpush.msra.mxu0 0.0
  %510 = vmatpush.msra.mxu0 0.0
  %511 = vmatpush.msra.mxu0 %v485
  %512 = vmatmul.f32.gmra.mxu0 %v482
  %v513 = vpop.f32.mrf.mxu0
  %v514 = vadd.f32 0.0, %v513
  %515 = vdwg.mxu0
  %516 = vmatpush.msra.mxu0 0.0
  %517 = vmatpush.msra.mxu0 0.0
  %518 = vmatpush.msra.mxu0 0.0
  %519 = vmatpush.msra.mxu0 0.0
  %520 = vmatpush.msra.mxu0 0.0
  %521 = vmatpush.msra.mxu0 0.0
  %522 = vmatpush.msra.mxu0 0.0
  %523 = vmatpush.msra.mxu0 0.0
  %524 = vmatpush.msra.mxu0 0.0
  %525 = vmatpush.msra.mxu0 0.0
  %526 = vmatpush.msra.mxu0 0.0
  %527 = vmatpush.msra.mxu0 0.0
  %528 = vmatpush.msra.mxu0 0.0
  %529 = vmatpush.msra.mxu0 0.0
  %530 = vmatpush.msra.mxu0 0.0
  %531 = vmatpush.msra.mxu0 %v488
  %532 = vmatmul.f32.gmra.mxu0 %v482
  %v533 = vpop.f32.mrf.mxu0
  %v534 = vadd.f32 0.0, %v533
  %535 = vdwg.mxu0
  %536 = vmatpush.msra.mxu0 0.0
  %537 = vmatpush.msra.mxu0 0.0
  %538 = vmatpush.msra.mxu0 0.0
  %539 = vmatpush.msra.mxu0 0.0
  %540 = vmatpush.msra.mxu0 0.0
  %541 = vmatpush.msra.mxu0 0.0
  %542 = vmatpush.msra.mxu0 0.0
  %543 = vmatpush.msra.mxu0 0.0
  %544 = vmatpush.msra.mxu0 0.0
  %545 = vmatpush.msra.mxu0 0.0
  %546 = vmatpush.msra.mxu0 0.0
  %547 = vmatpush.msra.mxu0 0.0
  %548 = vmatpush.msra.mxu0 0.0
  %549 = vmatpush.msra.mxu0 0.0
  %550 = vmatpush.msra.mxu0 0.0
  %551 = vmatpush.msra.mxu0 %v491
  %552 = vmatmul.f32.gmra.mxu0 %v482
  %v553 = vpop.f32.mrf.mxu0
  %v554 = vadd.f32 0.0, %v553
  %555 = vdwg.mxu0
  %556 = vmatpush.msra.mxu0 0.0
  %557 = vmatpush.msra.mxu0 0.0
  %558 = vmatpush.msra.mxu0 0.0
  %559 = vmatpush.msra.mxu0 0.0
  %560 = vmatpush.msra.mxu0 0.0
  %561 = vmatpush.msra.mxu0 0.0
  %562 = vmatpush.msra.mxu0 0.0
  %563 = vmatpush.msra.mxu0 0.0
  %564 = vmatpush.msra.mxu0 0.0
  %565 = vmatpush.msra.mxu0 0.0
  %566 = vmatpush.msra.mxu0 0.0
  %567 = vmatpush.msra.mxu0 0.0
  %568 = vmatpush.msra.mxu0 0.0
  %569 = vmatpush.msra.mxu0 0.0
  %570 = vmatpush.msra.mxu0 0.0
  %571 = vmatpush.msra.mxu0 %v494
  %572 = vmatmul.f32.gmra.mxu0 %v482
  %v573 = vpop.f32.mrf.mxu0
  %v574 = vadd.f32 0.0, %v573
  %575 = vdwg.mxu0
  %v576 = vadd.f32 %v437, %v514
  %v577 = vadd.f32 %v438, %v534
  %v578 = vadd.f32 %v439, %v554
  %v579 = vadd.f32 %v440, %v574
  %s580 = scalar_lea.vmem %s2, 32
  %v581 = vld [vmem:[%s580] sm:$0xff]
  %582 = vst [vmem:[#allocation1] ss:$2 sm:$0xff] %v17
  %s583 = scalar_lea.vmem [#allocation1], 16
  %584 = vst [vmem:[%s583] ss:$2 sm:$0xff] %v18
  %v585 = vld.sshfl [vmem:[#allocation1] sm:$0xff pattern:$0x75316420]
  %v586 = vld.sshfl [vmem:[#allocation1 + $0x8] sm:$0xff pattern:$0x75316420]
  %v587 = vld.sshfl [vmem:[#allocation1 + $0x10] sm:$0xff pattern:$0x75316420]
  %v588 = vld.sshfl [vmem:[#allocation1 + $0x18] sm:$0xff pattern:$0x75316420]
  %v590 = vsel %vm108, %v581, 0
  %v592 = vsel %vm112, %v585, 0
  %v594 = vsel %vm112, %v586, 0
  %v596 = vsel %vm112, %v587, 0
  %v598 = vsel %vm112, %v588, 0
  %600 = vmatpush.msra.mxu0 0.0
  %601 = vmatpush.msra.mxu0 0.0
  %602 = vmatpush.msra.mxu0 0.0
  %603 = vmatpush.msra.mxu0 0.0
  %604 = vmatpush.msra.mxu0 0.0
  %605 = vmatpush.msra.mxu0 0.0
  %606 = vmatpush.msra.mxu0 0.0
  %607 = vmatpush.msra.mxu0 0.0
  %608 = vmatpush.msra.mxu0 0.0
  %609 = vmatpush.msra.mxu0 0.0
  %610 = vmatpush.msra.mxu0 0.0
  %611 = vmatpush.msra.mxu0 0.0
  %612 = vmatpush.msra.mxu0 0.0
  %613 = vmatpush.msra.mxu0 0.0
  %614 = vmatpush.msra.mxu0 0.0
  %615 = vmatpush.msra.mxu0 %v592
  %616 = vmatmul.f32.gmra.mxu0 %v590
  %v617 = vpop.f32.mrf.mxu0
  %v618 = vadd.f32 0.0, %v617
  %619 = vdwg.mxu0
  %620 = vmatpush.msra.mxu0 0.0
  %621 = vmatpush.msra.mxu0 0.0
  %622 = vmatpush.msra.mxu0 0.0
  %623 = vmatpush.msra.mxu0 0.0
  %624 = vmatpush.msra.mxu0 0.0
  %625 = vmatpush.msra.mxu0 0.0
  %626 = vmatpush.msra.mxu0 0.0
  %627 = vmatpush.msra.mxu0 0.0
  %628 = vmatpush.msra.mxu0 0.0
  %629 = vmatpush.msra.mxu0 0.0
  %630 = vmatpush.msra.mxu0 0.0
  %631 = vmatpush.msra.mxu0 0.0
  %632 = vmatpush.msra.mxu0 0.0
  %633 = vmatpush.msra.mxu0 0.0
  %634 = vmatpush.msra.mxu0 0.0
  %635 = vmatpush.msra.mxu0 %v594
  %636 = vmatmul.f32.gmra.mxu0 %v590
  %v637 = vpop.f32.mrf.mxu0
  %v638 = vadd.f32 0.0, %v637
  %639 = vdwg.mxu0
  %640 = vmatpush.msra.mxu0 0.0
  %641 = vmatpush.msra.mxu0 0.0
  %642 = vmatpush.msra.mxu0 0.0
  %643 = vmatpush.msra.mxu0 0.0
  %644 = vmatpush.msra.mxu0 0.0
  %645 = vmatpush.msra.mxu0 0.0
  %646 = vmatpush.msra.mxu0 0.0
  %647 = vmatpush.msra.mxu0 0.0
  %648 = vmatpush.msra.mxu0 0.0
  %649 = vmatpush.msra.mxu0 0.0
  %650 = vmatpush.msra.mxu0 0.0
  %651 = vmatpush.msra.mxu0 0.0
  %652 = vmatpush.msra.mxu0 0.0
  %653 = vmatpush.msra.mxu0 0.0
  %654 = vmatpush.msra.mxu0 0.0
  %655 = vmatpush.msra.mxu0 %v596
  %656 = vmatmul.f32.gmra.mxu0 %v590
  %v657 = vpop.f32.mrf.mxu0
  %v658 = vadd.f32 0.0, %v657
  %659 = vdwg.mxu0
  %660 = vmatpush.msra.mxu0 0.0
  %661 = vmatpush.msra.mxu0 0.0
  %662 = vmatpush.msra.mxu0 0.0
  %663 = vmatpush.msra.mxu0 0.0
  %664 = vmatpush.msra.mxu0 0.0
  %665 = vmatpush.msra.mxu0 0.0
  %666 = vmatpush.msra.mxu0 0.0
  %667 = vmatpush.msra.mxu0 0.0
  %668 = vmatpush.msra.mxu0 0.0
  %669 = vmatpush.msra.mxu0 0.0
  %670 = vmatpush.msra.mxu0 0.0
  %671 = vmatpush.msra.mxu0 0.0
  %672 = vmatpush.msra.mxu0 0.0
  %673 = vmatpush.msra.mxu0 0.0
  %674 = vmatpush.msra.mxu0 0.0
  %675 = vmatpush.msra.mxu0 %v598
  %676 = vmatmul.f32.gmra.mxu0 %v590
  %v677 = vpop.f32.mrf.mxu0
  %v678 = vadd.f32 0.0, %v677
  %679 = vdwg.mxu0
  %v680 = vadd.f32 %v576, %v618
  %v681 = vadd.f32 %v577, %v638
  %v682 = vadd.f32 %v578, %v658
  %v683 = vadd.f32 %v579, %v678
  %684 = vst [vmem:[#allocation1] ss:$2 sm:$0xff] %v17
  %s685 = scalar_lea.vmem [#allocation1], 16
  %686 = vst [vmem:[%s685] ss:$2 sm:$0xff] %v18
  %v687 = vld.sshfl [vmem:[#allocation1] sm:$0xff pattern:$0x75316420]
  %v688 = vld.sshfl [vmem:[#allocation1 + $0x8] sm:$0xff pattern:$0x75316420]
  %v689 = vld.sshfl [vmem:[#allocation1 + $0x10] sm:$0xff pattern:$0x75316420]
  %v690 = vld.sshfl [vmem:[#allocation1 + $0x18] sm:$0xff pattern:$0x75316420]
  %695 = vrot.lane.b32.xlu0 %v687, 127
  %v696 = vpop.permute.xlu0 %695
  %697 = vrot.lane.b32.xlu0 %v688, 127
  %v698 = vpop.permute.xlu0 %697
  %699 = vrot.lane.b32.xlu0 %v689, 127
  %v700 = vpop.permute.xlu0 %699
  %701 = vrot.lane.b32.xlu0 %v690, 127
  %v702 = vpop.permute.xlu0 %701
  %vm703 = vcmp.lt.s32.totalorder %v44, 127
  %v704 = vsel %vm703, %v700, %v702
  %v705 = vsel %vm703, %v698, %v700
  %v706 = vsel %vm703, %v696, %v698
  %v707 = vsel %vm703, %v702, %v696
  %v708 = vsel %vm324, 1.0, 0.0
  %v710 = vperm.slane %v708, 0
  %v711 = vperm.slane %v708, 1
  %v712 = vperm.slane %v708, 2
  %v713 = vperm.slane %v708, 3
  %v718 = vmul.f32 %v706, %v710
  %v719 = vmul.f32 %v705, %v711
  %v720 = vmul.f32 %v704, %v712
  %v721 = vmul.f32 %v707, %v713
  %s722 = scalar_lea.vmem %s2, 40
  %v723 = vld [vmem:[%s722] sm:$0xff]
  %v725 = vsel %vm108, %v723, 0
  %v728 = vsel %vm112, %v718, 0
  %v731 = vsel %vm112, %v719, 0
  %v734 = vsel %vm112, %v720, 0
  %v737 = vsel %vm112, %v721, 0
  %739 = vmatpush.msra.mxu0 0.0
  %740 = vmatpush.msra.mxu0 0.0
  %741 = vmatpush.msra.mxu0 0.0
  %742 = vmatpush.msra.mxu0 0.0
  %743 = vmatpush.msra.mxu0 0.0
  %744 = vmatpush.msra.mxu0 0.0
  %745 = vmatpush.msra.mxu0 0.0
  %746 = vmatpush.msra.mxu0 0.0
  %747 = vmatpush.msra.mxu0 0.0
  %748 = vmatpush.msra.mxu0 0.0
  %749 = vmatpush.msra.mxu0 0.0
  %750 = vmatpush.msra.mxu0 0.0
  %751 = vmatpush.msra.mxu0 0.0
  %752 = vmatpush.msra.mxu0 0.0
  %753 = vmatpush.msra.mxu0 0.0
  %754 = vmatpush.msra.mxu0 %v728
  %755 = vmatmul.f32.gmra.mxu0 %v725
  %v756 = vpop.f32.mrf.mxu0
  %v757 = vadd.f32 0.0, %v756
  %758 = vdwg.mxu0
  %759 = vmatpush.msra.mxu0 0.0
  %760 = vmatpush.msra.mxu0 0.0
  %761 = vmatpush.msra.mxu0 0.0
  %762 = vmatpush.msra.mxu0 0.0
  %763 = vmatpush.msra.mxu0 0.0
  %764 = vmatpush.msra.mxu0 0.0
  %765 = vmatpush.msra.mxu0 0.0
  %766 = vmatpush.msra.mxu0 0.0
  %767 = vmatpush.msra.mxu0 0.0
  %768 = vmatpush.msra.mxu0 0.0
  %769 = vmatpush.msra.mxu0 0.0
  %770 = vmatpush.msra.mxu0 0.0
  %771 = vmatpush.msra.mxu0 0.0
  %772 = vmatpush.msra.mxu0 0.0
  %773 = vmatpush.msra.mxu0 0.0
  %774 = vmatpush.msra.mxu0 %v731
  %775 = vmatmul.f32.gmra.mxu0 %v725
  %v776 = vpop.f32.mrf.mxu0
  %v777 = vadd.f32 0.0, %v776
  %778 = vdwg.mxu0
  %779 = vmatpush.msra.mxu0 0.0
  %780 = vmatpush.msra.mxu0 0.0
  %781 = vmatpush.msra.mxu0 0.0
  %782 = vmatpush.msra.mxu0 0.0
  %783 = vmatpush.msra.mxu0 0.0
  %784 = vmatpush.msra.mxu0 0.0
  %785 = vmatpush.msra.mxu0 0.0
  %786 = vmatpush.msra.mxu0 0.0
  %787 = vmatpush.msra.mxu0 0.0
  %788 = vmatpush.msra.mxu0 0.0
  %789 = vmatpush.msra.mxu0 0.0
  %790 = vmatpush.msra.mxu0 0.0
  %791 = vmatpush.msra.mxu0 0.0
  %792 = vmatpush.msra.mxu0 0.0
  %793 = vmatpush.msra.mxu0 0.0
  %794 = vmatpush.msra.mxu0 %v734
  %795 = vmatmul.f32.gmra.mxu0 %v725
  %v796 = vpop.f32.mrf.mxu0
  %v797 = vadd.f32 0.0, %v796
  %798 = vdwg.mxu0
  %799 = vmatpush.msra.mxu0 0.0
  %800 = vmatpush.msra.mxu0 0.0
  %801 = vmatpush.msra.mxu0 0.0
  %802 = vmatpush.msra.mxu0 0.0
  %803 = vmatpush.msra.mxu0 0.0
  %804 = vmatpush.msra.mxu0 0.0
  %805 = vmatpush.msra.mxu0 0.0
  %806 = vmatpush.msra.mxu0 0.0
  %807 = vmatpush.msra.mxu0 0.0
  %808 = vmatpush.msra.mxu0 0.0
  %809 = vmatpush.msra.mxu0 0.0
  %810 = vmatpush.msra.mxu0 0.0
  %811 = vmatpush.msra.mxu0 0.0
  %812 = vmatpush.msra.mxu0 0.0
  %813 = vmatpush.msra.mxu0 0.0
  %814 = vmatpush.msra.mxu0 %v737
  %815 = vmatmul.f32.gmra.mxu0 %v725
  %v816 = vpop.f32.mrf.mxu0
  %v817 = vadd.f32 0.0, %v816
  %818 = vdwg.mxu0
  %v819 = vadd.f32 %v680, %v757
  %v820 = vadd.f32 %v681, %v777
  %v821 = vadd.f32 %v682, %v797
  %v822 = vadd.f32 %v683, %v817
  %823 = vst [vmem:[#allocation1] ss:$2 sm:$0xff] %v17
  %s824 = scalar_lea.vmem [#allocation1], 16
  %825 = vst [vmem:[%s824] ss:$2 sm:$0xff] %v18
  %v826 = vld.sshfl [vmem:[#allocation1] sm:$0xff pattern:$0x75316420]
  %v827 = vld.sshfl [vmem:[#allocation1 + $0x8] sm:$0xff pattern:$0x75316420]
  %v828 = vld.sshfl [vmem:[#allocation1 + $0x10] sm:$0xff pattern:$0x75316420]
  %v829 = vld.sshfl [vmem:[#allocation1 + $0x18] sm:$0xff pattern:$0x75316420]
  %834 = vrot.lane.b32.xlu0 %v826, 113
  %v835 = vpop.permute.xlu0 %834
  %836 = vrot.lane.b32.xlu0 %v827, 113
  %v837 = vpop.permute.xlu0 %836
  %838 = vrot.lane.b32.xlu0 %v828, 113
  %v839 = vpop.permute.xlu0 %838
  %840 = vrot.lane.b32.xlu0 %v829, 113
  %v841 = vpop.permute.xlu0 %840
  %vm842 = vcmp.lt.s32.totalorder %v44, 113
  %v843 = vsel %vm842, %v839, %v841
  %v844 = vsel %vm842, %v837, %v839
  %v845 = vsel %vm842, %v835, %v837
  %v846 = vsel %vm842, %v841, %v835
  %vm847 = vcmp.le.s32.totalorder %v19, 14
  %vm848 = vmand %vm847, %vm51
  %v849 = vsel %vm848, 1.0, 0.0
  %v851 = vperm.slane %v849, 0
  %v852 = vperm.slane %v849, 1
  %v853 = vperm.slane %v849, 2
  %v854 = vperm.slane %v849, 3
  %v859 = vmul.f32 %v845, %v851
  %v860 = vmul.f32 %v844, %v852
  %v861 = vmul.f32 %v843, %v853
  %v862 = vmul.f32 %v846, %v854
  %s863 = scalar_lea.vmem %s2, 48
  %v864 = vld [vmem:[%s863] sm:$0xff]
  %v866 = vsel %vm108, %v864, 0
  %v869 = vsel %vm112, %v859, 0
  %v872 = vsel %vm112, %v860, 0
  %v875 = vsel %vm112, %v861, 0
  %v878 = vsel %vm112, %v862, 0
  %880 = vmatpush.msra.mxu0 0.0
  %881 = vmatpush.msra.mxu0 0.0
  %882 = vmatpush.msra.mxu0 0.0
  %883 = vmatpush.msra.mxu0 0.0
  %884 = vmatpush.msra.mxu0 0.0
  %885 = vmatpush.msra.mxu0 0.0
  %886 = vmatpush.msra.mxu0 0.0
  %887 = vmatpush.msra.mxu0 0.0
  %888 = vmatpush.msra.mxu0 0.0
  %889 = vmatpush.msra.mxu0 0.0
  %890 = vmatpush.msra.mxu0 0.0
  %891 = vmatpush.msra.mxu0 0.0
  %892 = vmatpush.msra.mxu0 0.0
  %893 = vmatpush.msra.mxu0 0.0
  %894 = vmatpush.msra.mxu0 0.0
  %895 = vmatpush.msra.mxu0 %v869
  %896 = vmatmul.f32.gmra.mxu0 %v866
  %v897 = vpop.f32.mrf.mxu0
  %v898 = vadd.f32 0.0, %v897
  %899 = vdwg.mxu0
  %900 = vmatpush.msra.mxu0 0.0
  %901 = vmatpush.msra.mxu0 0.0
  %902 = vmatpush.msra.mxu0 0.0
  %903 = vmatpush.msra.mxu0 0.0
  %904 = vmatpush.msra.mxu0 0.0
  %905 = vmatpush.msra.mxu0 0.0
  %906 = vmatpush.msra.mxu0 0.0
  %907 = vmatpush.msra.mxu0 0.0
  %908 = vmatpush.msra.mxu0 0.0
  %909 = vmatpush.msra.mxu0 0.0
  %910 = vmatpush.msra.mxu0 0.0
  %911 = vmatpush.msra.mxu0 0.0
  %912 = vmatpush.msra.mxu0 0.0
  %913 = vmatpush.msra.mxu0 0.0
  %914 = vmatpush.msra.mxu0 0.0
  %915 = vmatpush.msra.mxu0 %v872
  %916 = vmatmul.f32.gmra.mxu0 %v866
  %v917 = vpop.f32.mrf.mxu0
  %v918 = vadd.f32 0.0, %v917
  %919 = vdwg.mxu0
  %920 = vmatpush.msra.mxu0 0.0
  %921 = vmatpush.msra.mxu0 0.0
  %922 = vmatpush.msra.mxu0 0.0
  %923 = vmatpush.msra.mxu0 0.0
  %924 = vmatpush.msra.mxu0 0.0
  %925 = vmatpush.msra.mxu0 0.0
  %926 = vmatpush.msra.mxu0 0.0
  %927 = vmatpush.msra.mxu0 0.0
  %928 = vmatpush.msra.mxu0 0.0
  %929 = vmatpush.msra.mxu0 0.0
  %930 = vmatpush.msra.mxu0 0.0
  %931 = vmatpush.msra.mxu0 0.0
  %932 = vmatpush.msra.mxu0 0.0
  %933 = vmatpush.msra.mxu0 0.0
  %934 = vmatpush.msra.mxu0 0.0
  %935 = vmatpush.msra.mxu0 %v875
  %936 = vmatmul.f32.gmra.mxu0 %v866
  %v937 = vpop.f32.mrf.mxu0
  %v938 = vadd.f32 0.0, %v937
  %939 = vdwg.mxu0
  %940 = vmatpush.msra.mxu0 0.0
  %941 = vmatpush.msra.mxu0 0.0
  %942 = vmatpush.msra.mxu0 0.0
  %943 = vmatpush.msra.mxu0 0.0
  %944 = vmatpush.msra.mxu0 0.0
  %945 = vmatpush.msra.mxu0 0.0
  %946 = vmatpush.msra.mxu0 0.0
  %947 = vmatpush.msra.mxu0 0.0
  %948 = vmatpush.msra.mxu0 0.0
  %949 = vmatpush.msra.mxu0 0.0
  %950 = vmatpush.msra.mxu0 0.0
  %951 = vmatpush.msra.mxu0 0.0
  %952 = vmatpush.msra.mxu0 0.0
  %953 = vmatpush.msra.mxu0 0.0
  %954 = vmatpush.msra.mxu0 0.0
  %955 = vmatpush.msra.mxu0 %v878
  %956 = vmatmul.f32.gmra.mxu0 %v866
  %v957 = vpop.f32.mrf.mxu0
  %v958 = vadd.f32 0.0, %v957
  %959 = vdwg.mxu0
  %v960 = vadd.f32 %v819, %v898
  %v961 = vadd.f32 %v820, %v918
  %v962 = vadd.f32 %v821, %v938
  %v963 = vadd.f32 %v822, %v958
  %964 = vst [vmem:[#allocation1] ss:$2 sm:$0xff] %v17
  %s965 = scalar_lea.vmem [#allocation1], 16
  %966 = vst [vmem:[%s965] ss:$2 sm:$0xff] %v18
  %v967 = vld.sshfl [vmem:[#allocation1] sm:$0xff pattern:$0x75316420]
  %v968 = vld.sshfl [vmem:[#allocation1 + $0x8] sm:$0xff pattern:$0x75316420]
  %v969 = vld.sshfl [vmem:[#allocation1 + $0x10] sm:$0xff pattern:$0x75316420]
  %v970 = vld.sshfl [vmem:[#allocation1 + $0x18] sm:$0xff pattern:$0x75316420]
  %975 = vrot.lane.b32.xlu0 %v967, 112
  %v976 = vpop.permute.xlu0 %975
  %977 = vrot.lane.b32.xlu0 %v968, 112
  %v978 = vpop.permute.xlu0 %977
  %979 = vrot.lane.b32.xlu0 %v969, 112
  %v980 = vpop.permute.xlu0 %979
  %981 = vrot.lane.b32.xlu0 %v970, 112
  %v982 = vpop.permute.xlu0 %981
  %vm983 = vcmp.lt.s32.totalorder %v44, 112
  %v984 = vsel %vm983, %v980, %v982
  %v985 = vsel %vm983, %v978, %v980
  %v986 = vsel %vm983, %v976, %v978
  %v987 = vsel %vm983, %v982, %v976
  %v988 = vsel %vm847, 1.0, 0.0
  %v990 = vperm.slane %v988, 0
  %v991 = vperm.slane %v988, 1
  %v992 = vperm.slane %v988, 2
  %v993 = vperm.slane %v988, 3
  %v998 = vmul.f32 %v986, %v990
  %v999 = vmul.f32 %v985, %v991
  %v1000 = vmul.f32 %v984, %v992
  %v1001 = vmul.f32 %v987, %v993
  %s1002 = scalar_lea.vmem %s2, 56
  %v1003 = vld [vmem:[%s1002] sm:$0xff]
  %v1005 = vsel %vm108, %v1003, 0
  %v1008 = vsel %vm112, %v998, 0
  %v1011 = vsel %vm112, %v999, 0
  %v1014 = vsel %vm112, %v1000, 0
  %v1017 = vsel %vm112, %v1001, 0
  %1019 = vmatpush.msra.mxu0 0.0
  %1020 = vmatpush.msra.mxu0 0.0
  %1021 = vmatpush.msra.mxu0 0.0
  %1022 = vmatpush.msra.mxu0 0.0
  %1023 = vmatpush.msra.mxu0 0.0
  %1024 = vmatpush.msra.mxu0 0.0
  %1025 = vmatpush.msra.mxu0 0.0
  %1026 = vmatpush.msra.mxu0 0.0
  %1027 = vmatpush.msra.mxu0 0.0
  %1028 = vmatpush.msra.mxu0 0.0
  %1029 = vmatpush.msra.mxu0 0.0
  %1030 = vmatpush.msra.mxu0 0.0
  %1031 = vmatpush.msra.mxu0 0.0
  %1032 = vmatpush.msra.mxu0 0.0
  %1033 = vmatpush.msra.mxu0 0.0
  %1034 = vmatpush.msra.mxu0 %v1008
  %1035 = vmatmul.f32.gmra.mxu0 %v1005
  %v1036 = vpop.f32.mrf.mxu0
  %v1037 = vadd.f32 0.0, %v1036
  %1038 = vdwg.mxu0
  %1039 = vmatpush.msra.mxu0 0.0
  %1040 = vmatpush.msra.mxu0 0.0
  %1041 = vmatpush.msra.mxu0 0.0
  %1042 = vmatpush.msra.mxu0 0.0
  %1043 = vmatpush.msra.mxu0 0.0
  %1044 = vmatpush.msra.mxu0 0.0
  %1045 = vmatpush.msra.mxu0 0.0
  %1046 = vmatpush.msra.mxu0 0.0
  %1047 = vmatpush.msra.mxu0 0.0
  %1048 = vmatpush.msra.mxu0 0.0
  %1049 = vmatpush.msra.mxu0 0.0
  %1050 = vmatpush.msra.mxu0 0.0
  %1051 = vmatpush.msra.mxu0 0.0
  %1052 = vmatpush.msra.mxu0 0.0
  %1053 = vmatpush.msra.mxu0 0.0
  %1054 = vmatpush.msra.mxu0 %v1011
  %1055 = vmatmul.f32.gmra.mxu0 %v1005
  %v1056 = vpop.f32.mrf.mxu0
  %v1057 = vadd.f32 0.0, %v1056
  %1058 = vdwg.mxu0
  %1059 = vmatpush.msra.mxu0 0.0
  %1060 = vmatpush.msra.mxu0 0.0
  %1061 = vmatpush.msra.mxu0 0.0
  %1062 = vmatpush.msra.mxu0 0.0
  %1063 = vmatpush.msra.mxu0 0.0
  %1064 = vmatpush.msra.mxu0 0.0
  %1065 = vmatpush.msra.mxu0 0.0
  %1066 = vmatpush.msra.mxu0 0.0
  %1067 = vmatpush.msra.mxu0 0.0
  %1068 = vmatpush.msra.mxu0 0.0
  %1069 = vmatpush.msra.mxu0 0.0
  %1070 = vmatpush.msra.mxu0 0.0
  %1071 = vmatpush.msra.mxu0 0.0
  %1072 = vmatpush.msra.mxu0 0.0
  %1073 = vmatpush.msra.mxu0 0.0
  %1074 = vmatpush.msra.mxu0 %v1014
  %1075 = vmatmul.f32.gmra.mxu0 %v1005
  %v1076 = vpop.f32.mrf.mxu0
  %v1077 = vadd.f32 0.0, %v1076
  %1078 = vdwg.mxu0
  %1079 = vmatpush.msra.mxu0 0.0
  %1080 = vmatpush.msra.mxu0 0.0
  %1081 = vmatpush.msra.mxu0 0.0
  %1082 = vmatpush.msra.mxu0 0.0
  %1083 = vmatpush.msra.mxu0 0.0
  %1084 = vmatpush.msra.mxu0 0.0
  %1085 = vmatpush.msra.mxu0 0.0
  %1086 = vmatpush.msra.mxu0 0.0
  %1087 = vmatpush.msra.mxu0 0.0
  %1088 = vmatpush.msra.mxu0 0.0
  %1089 = vmatpush.msra.mxu0 0.0
  %1090 = vmatpush.msra.mxu0 0.0
  %1091 = vmatpush.msra.mxu0 0.0
  %1092 = vmatpush.msra.mxu0 0.0
  %1093 = vmatpush.msra.mxu0 0.0
  %1094 = vmatpush.msra.mxu0 %v1017
  %1095 = vmatmul.f32.gmra.mxu0 %v1005
  %v1096 = vpop.f32.mrf.mxu0
  %v1097 = vadd.f32 0.0, %v1096
  %1098 = vdwg.mxu0
  %v1099 = vadd.f32 %v960, %v1037
  %v1100 = vadd.f32 %v961, %v1057
  %v1101 = vadd.f32 %v962, %v1077
  %v1102 = vadd.f32 %v963, %v1097
  %1103 = vst [vmem:[#allocation1] ss:$2 sm:$0xff] %v17
  %s1104 = scalar_lea.vmem [#allocation1], 16
  %1105 = vst [vmem:[%s1104] ss:$2 sm:$0xff] %v18
  %v1106 = vld.sshfl [vmem:[#allocation1] sm:$0xff pattern:$0x75316420]
  %v1107 = vld.sshfl [vmem:[#allocation1 + $0x8] sm:$0xff pattern:$0x75316420]
  %v1108 = vld.sshfl [vmem:[#allocation1 + $0x10] sm:$0xff pattern:$0x75316420]
  %v1109 = vld.sshfl [vmem:[#allocation1 + $0x18] sm:$0xff pattern:$0x75316420]
  %1114 = vrot.lane.b32.xlu0 %v1106, 111
  %v1115 = vpop.permute.xlu0 %1114
  %1116 = vrot.lane.b32.xlu0 %v1107, 111
  %v1117 = vpop.permute.xlu0 %1116
  %1118 = vrot.lane.b32.xlu0 %v1108, 111
  %v1119 = vpop.permute.xlu0 %1118
  %1120 = vrot.lane.b32.xlu0 %v1109, 111
  %v1121 = vpop.permute.xlu0 %1120
  %vm1122 = vcmp.lt.s32.totalorder %v44, 111
  %v1123 = vsel %vm1122, %v1119, %v1121
  %v1124 = vsel %vm1122, %v1117, %v1119
  %v1125 = vsel %vm1122, %v1115, %v1117
  %v1126 = vsel %vm1122, %v1121, %v1115
  %vm1127 = vmand %vm847, %vm324
  %v1128 = vsel %vm1127, 1.0, 0.0
  %v1130 = vperm.slane %v1128, 0
  %v1131 = vperm.slane %v1128, 1
  %v1132 = vperm.slane %v1128, 2
  %v1133 = vperm.slane %v1128, 3
  %v1138 = vmul.f32 %v1125, %v1130
  %v1139 = vmul.f32 %v1124, %v1131
  %v1140 = vmul.f32 %v1123, %v1132
  %v1141 = vmul.f32 %v1126, %v1133
  %s1142 = scalar_lea.vmem %s2, 64
  %v1143 = vld [vmem:[%s1142] sm:$0xff]
  %v1145 = vsel %vm108, %v1143, 0
  %v1148 = vsel %vm112, %v1138, 0
  %v1151 = vsel %vm112, %v1139, 0
  %v1154 = vsel %vm112, %v1140, 0
  %v1157 = vsel %vm112, %v1141, 0
  %1159 = vmatpush.msra.mxu0 0.0
  %1160 = vmatpush.msra.mxu0 0.0
  %1161 = vmatpush.msra.mxu0 0.0
  %1162 = vmatpush.msra.mxu0 0.0
  %1163 = vmatpush.msra.mxu0 0.0
  %1164 = vmatpush.msra.mxu0 0.0
  %1165 = vmatpush.msra.mxu0 0.0
  %1166 = vmatpush.msra.mxu0 0.0
  %1167 = vmatpush.msra.mxu0 0.0
  %1168 = vmatpush.msra.mxu0 0.0
  %1169 = vmatpush.msra.mxu0 0.0
  %1170 = vmatpush.msra.mxu0 0.0
  %1171 = vmatpush.msra.mxu0 0.0
  %1172 = vmatpush.msra.mxu0 0.0
  %1173 = vmatpush.msra.mxu0 0.0
  %1174 = vmatpush.msra.mxu0 %v1148
  %1175 = vmatmul.f32.gmra.mxu0 %v1145
  %v1176 = vpop.f32.mrf.mxu0
  %v1177 = vadd.f32 0.0, %v1176
  %1178 = vdwg.mxu0
  %1179 = vmatpush.msra.mxu0 0.0
  %1180 = vmatpush.msra.mxu0 0.0
  %1181 = vmatpush.msra.mxu0 0.0
  %1182 = vmatpush.msra.mxu0 0.0
  %1183 = vmatpush.msra.mxu0 0.0
  %1184 = vmatpush.msra.mxu0 0.0
  %1185 = vmatpush.msra.mxu0 0.0
  %1186 = vmatpush.msra.mxu0 0.0
  %1187 = vmatpush.msra.mxu0 0.0
  %1188 = vmatpush.msra.mxu0 0.0
  %1189 = vmatpush.msra.mxu0 0.0
  %1190 = vmatpush.msra.mxu0 0.0
  %1191 = vmatpush.msra.mxu0 0.0
  %1192 = vmatpush.msra.mxu0 0.0
  %1193 = vmatpush.msra.mxu0 0.0
  %1194 = vmatpush.msra.mxu0 %v1151
  %1195 = vmatmul.f32.gmra.mxu0 %v1145
  %v1196 = vpop.f32.mrf.mxu0
  %v1197 = vadd.f32 0.0, %v1196
  %1198 = vdwg.mxu0
  %1199 = vmatpush.msra.mxu0 0.0
  %1200 = vmatpush.msra.mxu0 0.0
  %1201 = vmatpush.msra.mxu0 0.0
  %1202 = vmatpush.msra.mxu0 0.0
  %1203 = vmatpush.msra.mxu0 0.0
  %1204 = vmatpush.msra.mxu0 0.0
  %1205 = vmatpush.msra.mxu0 0.0
  %1206 = vmatpush.msra.mxu0 0.0
  %1207 = vmatpush.msra.mxu0 0.0
  %1208 = vmatpush.msra.mxu0 0.0
  %1209 = vmatpush.msra.mxu0 0.0
  %1210 = vmatpush.msra.mxu0 0.0
  %1211 = vmatpush.msra.mxu0 0.0
  %1212 = vmatpush.msra.mxu0 0.0
  %1213 = vmatpush.msra.mxu0 0.0
  %1214 = vmatpush.msra.mxu0 %v1154
  %1215 = vmatmul.f32.gmra.mxu0 %v1145
  %v1216 = vpop.f32.mrf.mxu0
  %v1217 = vadd.f32 0.0, %v1216
  %1218 = vdwg.mxu0
  %1219 = vmatpush.msra.mxu0 0.0
  %1220 = vmatpush.msra.mxu0 0.0
  %1221 = vmatpush.msra.mxu0 0.0
  %1222 = vmatpush.msra.mxu0 0.0
  %1223 = vmatpush.msra.mxu0 0.0
  %1224 = vmatpush.msra.mxu0 0.0
  %1225 = vmatpush.msra.mxu0 0.0
  %1226 = vmatpush.msra.mxu0 0.0
  %1227 = vmatpush.msra.mxu0 0.0
  %1228 = vmatpush.msra.mxu0 0.0
  %1229 = vmatpush.msra.mxu0 0.0
  %1230 = vmatpush.msra.mxu0 0.0
  %1231 = vmatpush.msra.mxu0 0.0
  %1232 = vmatpush.msra.mxu0 0.0
  %1233 = vmatpush.msra.mxu0 0.0
  %1234 = vmatpush.msra.mxu0 %v1157
  %1235 = vmatmul.f32.gmra.mxu0 %v1145
  %v1236 = vpop.f32.mrf.mxu0
  %v1237 = vadd.f32 0.0, %v1236
  %1238 = vdwg.mxu0
  %v1239 = vadd.f32 %v1099, %v1177
  %v1240 = vadd.f32 %v1100, %v1197
  %v1241 = vadd.f32 %v1101, %v1217
  %v1242 = vadd.f32 %v1102, %v1237
  %v1243 = vmul.f32 %v1239, %v1239
  %v1244 = vmul.f32 %v1240, %v1240
  %v1245 = vmul.f32 %v1241, %v1241
  %v1246 = vmul.f32 %v1242, %v1242
  %v1247 = vadd.f32 %v1239, %v1240
  %v1248 = vadd.f32 %v1247, %v1241
  %v1249 = vadd.f32 %v1248, %v1242
  %1250 = vadd.xlane.f32.xlu0 %v1249
  %v1251 = vpop.xlane.xlu0 %1250
  %v1252 = vadd.f32 %v1243, %v1244
  %v1253 = vadd.f32 %v1252, %v1245
  %v1254 = vadd.f32 %v1253, %v1246
  %1255 = vadd.xlane.f32.xlu0 %v1254
  %v1256 = vpop.xlane.xlu0 %1255
  %v1257 = vmul.f32 %v1251, 0.001953125
  %v1258 = vmul.f32 %v1256, 0.001953125
  %v1259 = vmul.f32 %v1257, %v1257
  %v1260 = vsub.f32 %v1258, %v1259
  %v1261 = vmax.f32 %v1260, 0.0
  %v1262 = vadd.f32 %v1261, 1e-05
  %v1263 = vrsqrt.pop %v1262
  %v1264 = vmul.f32 %v1263, %v1262
  %v1265 = vmul.f32 %v1264, %v1263
  %v1266 = vmul.f32 0.5, %v1265
  %v1267 = vsub.f32 1.5, %v1266
  %v1268 = vmul.f32 %v1263, %v1267
  %vm1269 = vweird.f32 %v1262
  %vm1270 = vweird.f32 %v1263
  %vm1271 = vmor %vm1269, %vm1270
  %v1272 = vsel %vm1271, %v1263, %v1268
  %v1273 = vld [vmem:[%s3] sm:$0xff]
  %v1274 = vmul.f32 %v1272, %v1273
  %v1275 = vmul.f32 %v1257, %v1274
  %1277 = vrot.lane.b32.xlu0 %v1275, 1
  %v1278 = vpop.permute.xlu0 %1277
  %v1280 = vsub.f32 %v1273, %v1278
  %1282 = vset.pattern.permute.xlu0 0
  %1283 = vperm.xlu0 %1282, %v1274
  %v1284 = vpop.permute.xlu0 %1283
  %v1286 = vmul.f32 %v1239, %v1284
  %v1287 = vmul.f32 %v1240, %v1284
  %v1288 = vmul.f32 %v1241, %v1284
  %v1289 = vmul.f32 %v1242, %v1284
  %1291 = vset.pattern.permute.xlu0 1
  %1292 = vperm.xlu0 %1291, %v1280
  %v1293 = vpop.permute.xlu0 %1292
  %v1295 = vadd.f32 %v1286, %v1293
  %v1296 = vadd.f32 %v1287, %v1293
  %v1297 = vadd.f32 %v1288, %v1293
  %v1298 = vadd.f32 %v1289, %v1293
  %1299 = vst [vmem:[%s4] sm:$0xff] %v1295
  %1300 = vst [vmem:[%s4 + $0x8] sm:$0xff] %v1296
  %s1301 = scalar_lea.vmem %s4, 16
  %1302 = vst [vmem:[%s1301] sm:$0xff] %v1297
  %1303 = vst [vmem:[%s1301 + $0x8] sm:$0xff] %v1298
  // Predicated region
  $region18: #{dummy_model_forward.1} parent=0 // pred_check
    _
  $region19: #{dummy_model_forward.1} parent=0 // pred_check_branch
    %1305 = sbr.rel (0) target = $region21
  $region20: #{dummy_model_forward.1} parent=0 // pred_region
    _
  $region21: #{dummy_model_forward.1} parent=0 // pred_fallthru
    _
  // Predicated region
  $region22: #{dummy_model_forward.1} parent=0 // pred_check
    _
  $region23: #{dummy_model_forward.1} parent=0 // pred_check_branch
    %1307 = sbr.rel (0) target = $region25
  $region24: #{dummy_model_forward.1} parent=0 // pred_region
    _
  $region25: #{dummy_model_forward.1} parent=0 // pred_fallthru
    _

</llo_original>
